<compile_context>
chip_gen: v7x
topology: tpu7x:2x2x1
jax: 0.10.0
libtpu: 0.0.40
codegen_flags: <defaults>
</compile_context>

<pallas_src>
import functools

import jax
import jax.numpy as jnp
from jax.experimental import pallas as pl
from jax.experimental.pallas import tpu as pltpu


def _round_up(x, m):
    return (x + m - 1) // m * m


def _cdiv(a, b):
    return -(-a // b)


def _sigmoid(x):
    # One EUP push (tanh) + VPU ops instead of exp + reciprocal; exact identity.
    return 0.5 * jnp.tanh(0.5 * x) + 0.5


def _lstm_chunk_kernel(x_ref, wih_ref, whh_ref, b_ref, wd_ref, bd_ref,
                       out_ref, zx_ref, h_ref, c_ref,
                       *, seq_len, t_chunk, unroll, needs_mask):
    """One (batch_tile, seq_chunk) grid point.

    x_ref   : (T, Bt, Ip)   bf16  time-major input chunk (lane-padded)
    wih_ref : (Ip, 4*Hp)    bf16  W_ih^T, per-gate 128-lane-aligned segments
    whh_ref : (Hp, 4*Hp)    bf16  W_hh^T
    b_ref   : (1, 4*Hp)     f32   b_ih + b_hh
    wd_ref  : (Hp, Op)      bf16  dense W^T
    bd_ref  : (1, Op)       f32   dense bias
    out_ref : (Bt, Op)      f32   dense(last h) -- written only at the last chunk
    zx_ref  : (T, Bt, 4*Hp) bf16  scratch: per-chunk input projection
    h_ref   : (Bt, Hp)      bf16  persistent hidden state (carried across chunks)
    c_ref   : (Bt, Hp)      f32   persistent cell state
    """
    T, Bt, Ip = x_ref.shape
    Hp = whh_ref.shape[0]
    s = pl.program_id(1)
    n_s = pl.num_programs(1)

    # ---- Phase 0: init carried state at the start of each batch tile's sweep.
    @pl.when(s == 0)
    def _():
        h_ref[...] = jnp.zeros_like(h_ref)
        c_ref[...] = jnp.zeros_like(c_ref)

    # ---- Phase 1: input projection for the whole chunk as one MXU matmul
    # (M = T*Bt), bias folded in f32, stored bf16 (halves VMEM + store traffic).
    x2 = x_ref[...].reshape(T * Bt, Ip)
    zx = jnp.dot(x2, wih_ref[...], preferred_element_type=jnp.float32) + b_ref[...]
    zx_ref[...] = zx.astype(zx_ref.dtype).reshape(T, Bt, 4 * Hp)

    # ---- Phase 2: serial recurrence over the chunk. Only the h-side matmul is
    # on the serial path; gate slices land on 128-lane boundaries.
    def step(t, carry):
        h, c = carry                              # h: bf16, c: f32
        z = jnp.dot(h, whh_ref[...],
                    preferred_element_type=jnp.float32) + zx_ref[t]
        i_g = _sigmoid(z[:, 0:Hp])
        f_g = _sigmoid(z[:, Hp:2 * Hp])
        g_g = jnp.tanh(z[:, 2 * Hp:3 * Hp])
        o_g = _sigmoid(z[:, 3 * Hp:4 * Hp])
        c_new = f_g * c + i_g * g_g
        h_new = (o_g * jnp.tanh(c_new)).astype(h.dtype)
        if needs_mask:
            # Sequence was padded to a multiple of t_chunk: freeze state on
            # padded timesteps so the final h matches the unpadded sequence.
            valid = (s * t_chunk + t) < seq_len
            c_new = jnp.where(valid, c_new, c)
            h_new = jnp.where(valid, h_new, h)
        return h_new, c_new

    h, c = jax.lax.fori_loop(0, T, step, (h_ref[...], c_ref[...]), unroll=unroll)
    h_ref[...] = h
    c_ref[...] = c

    # ---- Phase 3: dense head on the last timestep's h.
    # TODO(synk): dropout is identity here (PyTorch eval-mode semantics).
    @pl.when(s == n_s - 1)
    def _():
        out_ref[...] = (jnp.dot(h, wd_ref[...],
                                preferred_element_type=jnp.float32) + bd_ref[...])


def lstm_model_forward(inputs, aux, params):
    """Mirror of LSTMModel.forward(inputs, aux). `aux` is unused, as in PyTorch."""
    del aux
    x = inputs.astype(jnp.float32)
    B, S, I = x.shape
    H = params["w_hh"].shape[1]
    O = params["w_dense"].shape[0]

    LANE = 128
    SUBB = 16                       # bf16 sublane packing: batch tile multiple of 16
    Hp = _round_up(H, LANE)
    Ip = _round_up(I, LANE)
    Op = _round_up(O, LANE)

    # --- Generation-aware budgets -------------------------------------------
    try:
        kind = jax.devices()[0].device_kind.lower()
    except Exception:  # pragma: no cover - be permissive about device queries
        kind = ""
    is_v7 = "v7" in kind
    multi_tc = is_v7 or ("v4" in kind) or ("v5p" in kind)   # chips with 2 TCs/device
    vmem_limit = (48 << 20) if is_v7 else (96 << 20)        # leave headroom

    # --- Batch tiling: minimal padding, multiple of 16, cap 256 (MXU rows),
    # split >= 2 ways on multi-TC chips so both cores get work.
    max_btile = 256
    if multi_tc and B > SUBB:
        n_bt = max(2, _cdiv(B, max_btile))
    else:
        n_bt = _cdiv(B, max_btile)
    b_tile = min(max_btile, _round_up(_cdiv(B, n_bt), SUBB))
    Bp = _round_up(B, b_tile)

    # --- Single-buffer the invariant weights when they are big enough to matter.
    w_bytes = 2 * ((Ip + Hp) * 4 * Hp + Hp * Op)             # bf16 weight bytes
    single_buffer_w = (w_bytes >= (2 << 20)) and hasattr(pl, "Buffered")

    # --- Sequence chunking so VMEM is bounded independent of S.
    per_t = b_tile * (2 * Ip * 2 + 4 * Hp * 2)   # 2x (x chunk, bf16) + zx chunk (bf16)
    fixed = (w_bytes * (1 if single_buffer_w else 2)
             + 4 * (4 * Hp + Op)                 # f32 biases
             + b_tile * Hp * (2 + 4)             # h (bf16) + c (f32) scratch
             + 2 * b_tile * Op * 4               # double-buffered output block
             + (1 << 20))                        # slack
    budget = int(vmem_limit * 0.75) - fixed
    T_chunk = int(max(1, min(S, budget // per_t, 256)))
    Sp = _round_up(S, T_chunk)
    n_sc = Sp // T_chunk
    needs_mask = Sp != S

    # --- Unroll gated on the per-step z working set, not just S.
    z_bytes = b_tile * 4 * Hp * 4
    if z_bytes <= 64 * 1024:
        unroll = True if T_chunk <= 32 else 8
    elif z_bytes <= 256 * 1024:
        unroll = 4
    else:
        unroll = 2

    # --- Weights: PyTorch layout (4H, D), gate order i,f,g,o.  Build transposed
    # (Dp, 4*Hp) bf16 weights; each gate occupies a 128-lane-aligned Hp segment
    # (zero padding is mathematically inert given zero initial state).
    def prep_w(w, Dp):
        D = w.shape[1]
        w4 = w.reshape(4, H, D)
        w4 = jnp.pad(w4, ((0, 0), (0, Hp - H), (0, Dp - D)))
        return jnp.transpose(w4, (2, 0, 1)).reshape(Dp, 4 * Hp).astype(jnp.bfloat16)

    wih_t = prep_w(params["w_ih"], Ip)                                     # (Ip, 4Hp)
    whh_t = prep_w(params["w_hh"], Hp)                                     # (Hp, 4Hp)
    bias = jnp.pad((params["b_ih"] + params["b_hh"]).reshape(4, H),
                   ((0, 0), (0, Hp - H))).reshape(1, 4 * Hp).astype(jnp.float32)
    wd_t = jnp.pad(params["w_dense"].T,
                   ((0, Hp - H), (0, Op - O))).astype(jnp.bfloat16)        # (Hp, Op)
    bd = jnp.pad(params["b_dense"], (0, Op - O)).reshape(1, Op).astype(jnp.float32)

    # --- Inputs: time-major, padded (seq / batch / feature), bf16 for the MXU.
    x_p = jnp.pad(jnp.swapaxes(x, 0, 1),
                  ((0, Sp - S), (0, Bp - B), (0, Ip - I))).astype(jnp.bfloat16)

    def const_spec(a, single=False):
        kw = {}
        if single:
            kw["pipeline_mode"] = pl.Buffered(1)
        return pl.BlockSpec(a.shape, lambda b, s: (0,) * a.ndim, **kw)

    kernel = functools.partial(_lstm_chunk_kernel,
                               seq_len=S, t_chunk=T_chunk,
                               unroll=unroll, needs_mask=needs_mask)

    out = pl.pallas_call(
        kernel,
        out_shape=jax.ShapeDtypeStruct((Bp, Op), jnp.float32),
        grid_spec=pltpu.PrefetchScalarGridSpec(
            num_scalar_prefetch=0,
            grid=(Bp // b_tile, n_sc),                 # (batch parallel, seq serial)
            in_specs=[
                pl.BlockSpec((T_chunk, b_tile, Ip), lambda b, s: (s, b, 0)),
                const_spec(wih_t, single_buffer_w),
                const_spec(whh_t, single_buffer_w),
                const_spec(bias),
                const_spec(wd_t, single_buffer_w),
                const_spec(bd),
            ],
            out_specs=pl.BlockSpec((b_tile, Op), lambda b, s: (b, 0)),
            scratch_shapes=[
                pltpu.VMEM((T_chunk, b_tile, 4 * Hp), jnp.bfloat16),  # zx chunk
                pltpu.VMEM((b_tile, Hp), jnp.bfloat16),               # h carry
                pltpu.VMEM((b_tile, Hp), jnp.float32),                # c carry
            ],
        ),
        compiler_params=pltpu.CompilerParams(
            dimension_semantics=("parallel", "arbitrary"),
            vmem_limit_bytes=vmem_limit),
    )(x_p, wih_t, whh_t, bias, wd_t, bd)
    return out[:B, :O]


def init_params(key, input_size, hidden_size, out_size):
    ks = jax.random.split(key, 6)
    s = 1.0 / jnp.sqrt(hidden_size)
    return {
        "w_ih": jax.random.uniform(ks[0], (4 * hidden_size, input_size), jnp.float32, -s, s),
        "w_hh": jax.random.uniform(ks[1], (4 * hidden_size, hidden_size), jnp.float32, -s, s),
        "b_ih": jax.random.uniform(ks[2], (4 * hidden_size,), jnp.float32, -s, s),
        "b_hh": jax.random.uniform(ks[3], (4 * hidden_size,), jnp.float32, -s, s),
        "w_dense": jax.random.uniform(ks[4], (out_size, hidden_size), jnp.float32, -s, s),
        "b_dense": jax.random.uniform(ks[5], (out_size,), jnp.float32, -s, s),
    }


def _reference_forward(inputs, params, matmul_dtype=jnp.float32):
    """Pure-JAX reference of the PyTorch forward (eval mode)."""
    x = inputs.astype(jnp.float32)
    B, S, I = x.shape
    H = params["w_hh"].shape[1]
    wih_t = params["w_ih"].T.astype(matmul_dtype)
    whh_t = params["w_hh"].T.astype(matmul_dtype)
    bias = (params["b_ih"] + params["b_hh"]).astype(jnp.float32)
    wd_t = params["w_dense"].T.astype(matmul_dtype)
    bd = params["b_dense"]

    def step(carry, x_t):
        h, c = carry
        z = (jnp.dot(x_t.astype(matmul_dtype), wih_t, preferred_element_type=jnp.float32)
             + jnp.dot(h.astype(matmul_dtype), whh_t, preferred_element_type=jnp.float32)
             + bias)
        i = jax.nn.sigmoid(z[:, 0:H])
        f = jax.nn.sigmoid(z[:, H:2 * H])
        g = jnp.tanh(z[:, 2 * H:3 * H])
        o = jax.nn.sigmoid(z[:, 3 * H:4 * H])
        c = f * c + i * g
        h = o * jnp.tanh(c)
        return (h, c), None

    h0 = jnp.zeros((B, H), jnp.float32)
    (h_last, _), _ = jax.lax.scan(step, (h0, h0), jnp.swapaxes(x, 0, 1))
    return (jnp.dot(h_last.astype(matmul_dtype), wd_t,
                    preferred_element_type=jnp.float32) + bd)


if __name__ == "__main__":
    key = jax.random.PRNGKey(0)
    B, S, I, H, O = 8, 8, 16, 32, 4

    k_in, k_aux, k_p = jax.random.split(key, 3)
    inputs = jax.random.normal(k_in, (B, S, I), jnp.float32)
    aux = jax.random.normal(k_aux, (B, S, 2), jnp.float32)   # unused, like PyTorch
    params = init_params(k_p, I, H, O)

    out = jax.block_until_ready(lstm_model_forward(inputs, aux, params))
    assert out.shape == (B, O), out.shape

    ref_bf16 = _reference_forward(inputs, params, jnp.bfloat16)  # precision-matched
    ref_f32 = _reference_forward(inputs, params, jnp.float32)    # PyTorch f32 semantics
    err_b = float(jnp.max(jnp.abs(out - ref_bf16)))
    err_f = float(jnp.max(jnp.abs(out - ref_f32)))
    assert jnp.allclose(out, ref_bf16, atol=2e-2, rtol=2e-2), f"bf16-ref mismatch {err_b}"
    assert jnp.allclose(out, ref_f32, atol=6e-2, rtol=6e-2), f"f32-ref mismatch {err_f}"

    print("KERNEL_OK")
</pallas_src>

<mosaic_0001>
module attributes {stable_mosaic.version = 11 : i64} {
  func.func @_lstm_chunk_kernel(%arg0: i32, %arg1: i32, %arg2: memref<8x16x128xbf16, #tpu.memory_space<vmem>>, %arg3: memref<128x512xbf16, #tpu.memory_space<vmem>>, %arg4: memref<128x512xbf16, #tpu.memory_space<vmem>>, %arg5: memref<1x512xf32, #tpu.memory_space<vmem>>, %arg6: memref<128x128xbf16, #tpu.memory_space<vmem>>, %arg7: memref<1x128xf32, #tpu.memory_space<vmem>>, %arg8: memref<16x128xf32, #tpu.memory_space<vmem>>, %arg9: memref<8x16x512xbf16, #tpu.memory_space<vmem>>, %arg10: memref<16x128xbf16, #tpu.memory_space<vmem>>, %arg11: memref<16x128xf32, #tpu.memory_space<vmem>>) attributes {dimension_semantics = [#tpu.dimension_semantics<parallel>, #tpu.dimension_semantics<arbitrary>], iteration_bounds = array<i64: 1, 1>, scalar_prefetch = 0 : i64, scratch_operands = 3 : i64, tpu.core_type = #tpu.core_type<tc>, window_params = [{transform_indices = @transform_0, window_bounds = array<i64: 8, 16, 128>}, {pipeline_mode = #tpu.pipeline_mode<synchronous>, transform_indices = @transform_1, window_bounds = array<i64: 128, 512>}, {pipeline_mode = #tpu.pipeline_mode<synchronous>, transform_indices = @transform_2, window_bounds = array<i64: 128, 512>}, {pipeline_mode = #tpu.pipeline_mode<synchronous>, transform_indices = @transform_3, window_bounds = array<i64: 1, 512>}, {pipeline_mode = #tpu.pipeline_mode<synchronous>, transform_indices = @transform_4, window_bounds = array<i64: 128, 128>}, {pipeline_mode = #tpu.pipeline_mode<synchronous>, transform_indices = @transform_5, window_bounds = array<i64: 1, 128>}, {transform_indices = @transform_6, window_bounds = array<i64: 16, 128>}]} {
    %c0_i32 = arith.constant 0 : i32
    %0 = arith.cmpi eq, %arg1, %c0_i32 : i32
    %1 = arith.extui %0 : i1 to i32
    %c0_i32_0 = arith.constant 0 : i32
    %2 = arith.cmpi ne, %1, %c0_i32_0 : i32
    scf.if %2 {
      %cst_133 = arith.constant 0.000000e+00 : bf16
      %332 = vector.broadcast %cst_133 : bf16 to vector<16x128xbf16>
      %c0_134 = arith.constant 0 : index
      %c0_135 = arith.constant 0 : index
      %333 = vector.load %arg10[%c0_134, %c0_135] : memref<16x128xbf16, #tpu.memory_space<vmem>>, vector<16x128xbf16>
      tpu.vector_store %arg10[%c0_134, %c0_135], %332 {strides = array<i32>} : memref<16x128xbf16, #tpu.memory_space<vmem>>, vector<16x128xbf16>,
      %cst_136 = arith.constant 0.000000e+00 : f32
      %334 = vector.broadcast %cst_136 : f32 to vector<16x128xf32>
      %c0_137 = arith.constant 0 : index
      %c0_138 = arith.constant 0 : index
      %335 = vector.load %arg11[%c0_137, %c0_138] : memref<16x128xf32, #tpu.memory_space<vmem>>, vector<16x128xf32>
      tpu.vector_store %arg11[%c0_137, %c0_138], %334 {strides = array<i32>} : memref<16x128xf32, #tpu.memory_space<vmem>>, vector<16x128xf32>,
    } else {
    }
    %c0 = arith.constant 0 : index
    %c0_1 = arith.constant 0 : index
    %c0_2 = arith.constant 0 : index
    %3 = vector.load %arg2[%c0, %c0_1, %c0_2] : memref<8x16x128xbf16, #tpu.memory_space<vmem>>, vector<8x16x128xbf16>
    %4 = vector.shape_cast %3 : vector<8x16x128xbf16> to vector<128x128xbf16>
    %c0_3 = arith.constant 0 : index
    %c0_4 = arith.constant 0 : index
    %5 = vector.load %arg3[%c0_3, %c0_4] : memref<128x512xbf16, #tpu.memory_space<vmem>>, vector<128x512xbf16>
    %cst = arith.constant dense<0.000000e+00> : vector<128x512xf32>
    %6 = tpu.matmul %4, %5, %cst {dimension_numbers = #tpu.dot_dimension_numbers<[1], [0], [0], [1], [0, 0, 1, 1], [], []>} : vector<128x128xbf16>, vector<128x512xbf16>, vector<128x512xf32> -> vector<128x512xf32>
    %c0_5 = arith.constant 0 : index
    %c0_6 = arith.constant 0 : index
    %7 = vector.load %arg5[%c0_5, %c0_6] : memref<1x512xf32, #tpu.memory_space<vmem>>, vector<1x512xf32>
    %8 = vector.broadcast %7 : vector<1x512xf32> to vector<128x512xf32>
    %9 = arith.addf %6, %8 : vector<128x512xf32>
    %10 = arith.truncf %9 : vector<128x512xf32> to vector<128x512xbf16>
    %11 = vector.shape_cast %10 : vector<128x512xbf16> to vector<8x16x512xbf16>
    %c0_7 = arith.constant 0 : index
    %c0_8 = arith.constant 0 : index
    %c0_9 = arith.constant 0 : index
    %12 = vector.load %arg9[%c0_7, %c0_8, %c0_9] : memref<8x16x512xbf16, #tpu.memory_space<vmem>>, vector<8x16x512xbf16>
    tpu.vector_store %arg9[%c0_7, %c0_8, %c0_9], %11 {strides = array<i32>} : memref<8x16x512xbf16, #tpu.memory_space<vmem>>, vector<8x16x512xbf16>,
    %c0_10 = arith.constant 0 : index
    %c0_11 = arith.constant 0 : index
    %13 = vector.load %arg10[%c0_10, %c0_11] : memref<16x128xbf16, #tpu.memory_space<vmem>>, vector<16x128xbf16>
    %c0_12 = arith.constant 0 : index
    %c0_13 = arith.constant 0 : index
    %14 = vector.load %arg11[%c0_12, %c0_13] : memref<16x128xf32, #tpu.memory_space<vmem>>, vector<16x128xf32>
    %c0_i32_14 = arith.constant 0 : i32
    %c0_15 = arith.constant 0 : index
    %c0_16 = arith.constant 0 : index
    %15 = vector.load %arg4[%c0_15, %c0_16] : memref<128x512xbf16, #tpu.memory_space<vmem>>, vector<128x512xbf16>
    %cst_17 = arith.constant dense<0.000000e+00> : vector<16x512xf32>
    %16 = tpu.matmul %13, %15, %cst_17 {dimension_numbers = #tpu.dot_dimension_numbers<[1], [0], [0], [1], [0, 0, 1, 1], [], []>} : vector<16x128xbf16>, vector<128x512xbf16>, vector<16x512xf32> -> vector<16x512xf32>
    %17 = arith.index_cast %c0_i32_14 : i32 to index
    %c0_18 = arith.constant 0 : index
    %c0_19 = arith.constant 0 : index
    %18 = vector.load %arg9[%17, %c0_18, %c0_19] : memref<8x16x512xbf16, #tpu.memory_space<vmem>>, vector<1x16x512xbf16>
    %19 = vector.shape_cast %18 : vector<1x16x512xbf16> to vector<16x512xbf16>
    %20 = arith.extf %19 : vector<16x512xbf16> to vector<16x512xf32>
    %21 = arith.addf %16, %20 : vector<16x512xf32>
    %22 = vector.extract_strided_slice %21 {offsets = [0, 0], sizes = [16, 128], strides = [1, 1]} : vector<16x512xf32> to vector<16x128xf32>
    %cst_20 = arith.constant 5.000000e-01 : f32
    %23 = vector.broadcast %cst_20 : f32 to vector<16x128xf32>
    %24 = arith.mulf %23, %22 : vector<16x128xf32>
    %25 = math.tanh %24 : vector<16x128xf32>
    %cst_21 = arith.constant 5.000000e-01 : f32
    %26 = vector.broadcast %cst_21 : f32 to vector<16x128xf32>
    %27 = arith.mulf %26, %25 : vector<16x128xf32>
    %cst_22 = arith.constant 5.000000e-01 : f32
    %28 = vector.broadcast %cst_22 : f32 to vector<16x128xf32>
    %29 = arith.addf %27, %28 : vector<16x128xf32>
    %30 = vector.extract_strided_slice %21 {offsets = [0, 128], sizes = [16, 128], strides = [1, 1]} : vector<16x512xf32> to vector<16x128xf32>
    %cst_23 = arith.constant 5.000000e-01 : f32
    %31 = vector.broadcast %cst_23 : f32 to vector<16x128xf32>
    %32 = arith.mulf %31, %30 : vector<16x128xf32>
    %33 = math.tanh %32 : vector<16x128xf32>
    %cst_24 = arith.constant 5.000000e-01 : f32
    %34 = vector.broadcast %cst_24 : f32 to vector<16x128xf32>
    %35 = arith.mulf %34, %33 : vector<16x128xf32>
    %cst_25 = arith.constant 5.000000e-01 : f32
    %36 = vector.broadcast %cst_25 : f32 to vector<16x128xf32>
    %37 = arith.addf %35, %36 : vector<16x128xf32>
    %38 = vector.extract_strided_slice %21 {offsets = [0, 256], sizes = [16, 128], strides = [1, 1]} : vector<16x512xf32> to vector<16x128xf32>
    %39 = math.tanh %38 : vector<16x128xf32>
    %40 = vector.extract_strided_slice %21 {offsets = [0, 384], sizes = [16, 128], strides = [1, 1]} : vector<16x512xf32> to vector<16x128xf32>
    %cst_26 = arith.constant 5.000000e-01 : f32
    %41 = vector.broadcast %cst_26 : f32 to vector<16x128xf32>
    %42 = arith.mulf %41, %40 : vector<16x128xf32>
    %43 = math.tanh %42 : vector<16x128xf32>
    %cst_27 = arith.constant 5.000000e-01 : f32
    %44 = vector.broadcast %cst_27 : f32 to vector<16x128xf32>
    %45 = arith.mulf %44, %43 : vector<16x128xf32>
    %cst_28 = arith.constant 5.000000e-01 : f32
    %46 = vector.broadcast %cst_28 : f32 to vector<16x128xf32>
    %47 = arith.addf %45, %46 : vector<16x128xf32>
    %48 = arith.mulf %37, %14 : vector<16x128xf32>
    %49 = arith.mulf %29, %39 : vector<16x128xf32>
    %50 = arith.addf %48, %49 : vector<16x128xf32>
    %51 = math.tanh %50 : vector<16x128xf32>
    %52 = arith.mulf %47, %51 : vector<16x128xf32>
    %53 = arith.truncf %52 : vector<16x128xf32> to vector<16x128xbf16>
    %c1_i32 = arith.constant 1 : i32
    %c0_29 = arith.constant 0 : index
    %c0_30 = arith.constant 0 : index
    %54 = vector.load %arg4[%c0_29, %c0_30] : memref<128x512xbf16, #tpu.memory_space<vmem>>, vector<128x512xbf16>
    %cst_31 = arith.constant dense<0.000000e+00> : vector<16x512xf32>
    %55 = tpu.matmul %53, %54, %cst_31 {dimension_numbers = #tpu.dot_dimension_numbers<[1], [0], [0], [1], [0, 0, 1, 1], [], []>} : vector<16x128xbf16>, vector<128x512xbf16>, vector<16x512xf32> -> vector<16x512xf32>
    %56 = arith.index_cast %c1_i32 : i32 to index
    %c0_32 = arith.constant 0 : index
    %c0_33 = arith.constant 0 : index
    %57 = vector.load %arg9[%56, %c0_32, %c0_33] : memref<8x16x512xbf16, #tpu.memory_space<vmem>>, vector<1x16x512xbf16>
    %58 = vector.shape_cast %57 : vector<1x16x512xbf16> to vector<16x512xbf16>
    %59 = arith.extf %58 : vector<16x512xbf16> to vector<16x512xf32>
    %60 = arith.addf %55, %59 : vector<16x512xf32>
    %61 = vector.extract_strided_slice %60 {offsets = [0, 0], sizes = [16, 128], strides = [1, 1]} : vector<16x512xf32> to vector<16x128xf32>
    %cst_34 = arith.constant 5.000000e-01 : f32
    %62 = vector.broadcast %cst_34 : f32 to vector<16x128xf32>
    %63 = arith.mulf %62, %61 : vector<16x128xf32>
    %64 = math.tanh %63 : vector<16x128xf32>
    %cst_35 = arith.constant 5.000000e-01 : f32
    %65 = vector.broadcast %cst_35 : f32 to vector<16x128xf32>
    %66 = arith.mulf %65, %64 : vector<16x128xf32>
    %cst_36 = arith.constant 5.000000e-01 : f32
    %67 = vector.broadcast %cst_36 : f32 to vector<16x128xf32>
    %68 = arith.addf %66, %67 : vector<16x128xf32>
    %69 = vector.extract_strided_slice %60 {offsets = [0, 128], sizes = [16, 128], strides = [1, 1]} : vector<16x512xf32> to vector<16x128xf32>
    %cst_37 = arith.constant 5.000000e-01 : f32
    %70 = vector.broadcast %cst_37 : f32 to vector<16x128xf32>
    %71 = arith.mulf %70, %69 : vector<16x128xf32>
    %72 = math.tanh %71 : vector<16x128xf32>
    %cst_38 = arith.constant 5.000000e-01 : f32
    %73 = vector.broadcast %cst_38 : f32 to vector<16x128xf32>
    %74 = arith.mulf %73, %72 : vector<16x128xf32>
    %cst_39 = arith.constant 5.000000e-01 : f32
    %75 = vector.broadcast %cst_39 : f32 to vector<16x128xf32>
    %76 = arith.addf %74, %75 : vector<16x128xf32>
    %77 = vector.extract_strided_slice %60 {offsets = [0, 256], sizes = [16, 128], strides = [1, 1]} : vector<16x512xf32> to vector<16x128xf32>
    %78 = math.tanh %77 : vector<16x128xf32>
    %79 = vector.extract_strided_slice %60 {offsets = [0, 384], sizes = [16, 128], strides = [1, 1]} : vector<16x512xf32> to vector<16x128xf32>
    %cst_40 = arith.constant 5.000000e-01 : f32
    %80 = vector.broadcast %cst_40 : f32 to vector<16x128xf32>
    %81 = arith.mulf %80, %79 : vector<16x128xf32>
    %82 = math.tanh %81 : vector<16x128xf32>
    %cst_41 = arith.constant 5.000000e-01 : f32
    %83 = vector.broadcast %cst_41 : f32 to vector<16x128xf32>
    %84 = arith.mulf %83, %82 : vector<16x128xf32>
    %cst_42 = arith.constant 5.000000e-01 : f32
    %85 = vector.broadcast %cst_42 : f32 to vector<16x128xf32>
    %86 = arith.addf %84, %85 : vector<16x128xf32>
    %87 = arith.mulf %76, %50 : vector<16x128xf32>
    %88 = arith.mulf %68, %78 : vector<16x128xf32>
    %89 = arith.addf %87, %88 : vector<16x128xf32>
    %90 = math.tanh %89 : vector<16x128xf32>
    %91 = arith.mulf %86, %90 : vector<16x128xf32>
    %92 = arith.truncf %91 : vector<16x128xf32> to vector<16x128xbf16>
    %c2_i32 = arith.constant 2 : i32
    %c0_43 = arith.constant 0 : index
    %c0_44 = arith.constant 0 : index
    %93 = vector.load %arg4[%c0_43, %c0_44] : memref<128x512xbf16, #tpu.memory_space<vmem>>, vector<128x512xbf16>
    %cst_45 = arith.constant dense<0.000000e+00> : vector<16x512xf32>
    %94 = tpu.matmul %92, %93, %cst_45 {dimension_numbers = #tpu.dot_dimension_numbers<[1], [0], [0], [1], [0, 0, 1, 1], [], []>} : vector<16x128xbf16>, vector<128x512xbf16>, vector<16x512xf32> -> vector<16x512xf32>
    %95 = arith.index_cast %c2_i32 : i32 to index
    %c0_46 = arith.constant 0 : index
    %c0_47 = arith.constant 0 : index
    %96 = vector.load %arg9[%95, %c0_46, %c0_47] : memref<8x16x512xbf16, #tpu.memory_space<vmem>>, vector<1x16x512xbf16>
    %97 = vector.shape_cast %96 : vector<1x16x512xbf16> to vector<16x512xbf16>
    %98 = arith.extf %97 : vector<16x512xbf16> to vector<16x512xf32>
    %99 = arith.addf %94, %98 : vector<16x512xf32>
    %100 = vector.extract_strided_slice %99 {offsets = [0, 0], sizes = [16, 128], strides = [1, 1]} : vector<16x512xf32> to vector<16x128xf32>
    %cst_48 = arith.constant 5.000000e-01 : f32
    %101 = vector.broadcast %cst_48 : f32 to vector<16x128xf32>
    %102 = arith.mulf %101, %100 : vector<16x128xf32>
    %103 = math.tanh %102 : vector<16x128xf32>
    %cst_49 = arith.constant 5.000000e-01 : f32
    %104 = vector.broadcast %cst_49 : f32 to vector<16x128xf32>
    %105 = arith.mulf %104, %103 : vector<16x128xf32>
    %cst_50 = arith.constant 5.000000e-01 : f32
    %106 = vector.broadcast %cst_50 : f32 to vector<16x128xf32>
    %107 = arith.addf %105, %106 : vector<16x128xf32>
    %108 = vector.extract_strided_slice %99 {offsets = [0, 128], sizes = [16, 128], strides = [1, 1]} : vector<16x512xf32> to vector<16x128xf32>
    %cst_51 = arith.constant 5.000000e-01 : f32
    %109 = vector.broadcast %cst_51 : f32 to vector<16x128xf32>
    %110 = arith.mulf %109, %108 : vector<16x128xf32>
    %111 = math.tanh %110 : vector<16x128xf32>
    %cst_52 = arith.constant 5.000000e-01 : f32
    %112 = vector.broadcast %cst_52 : f32 to vector<16x128xf32>
    %113 = arith.mulf %112, %111 : vector<16x128xf32>
    %cst_53 = arith.constant 5.000000e-01 : f32
    %114 = vector.broadcast %cst_53 : f32 to vector<16x128xf32>
    %115 = arith.addf %113, %114 : vector<16x128xf32>
    %116 = vector.extract_strided_slice %99 {offsets = [0, 256], sizes = [16, 128], strides = [1, 1]} : vector<16x512xf32> to vector<16x128xf32>
    %117 = math.tanh %116 : vector<16x128xf32>
    %118 = vector.extract_strided_slice %99 {offsets = [0, 384], sizes = [16, 128], strides = [1, 1]} : vector<16x512xf32> to vector<16x128xf32>
    %cst_54 = arith.constant 5.000000e-01 : f32
    %119 = vector.broadcast %cst_54 : f32 to vector<16x128xf32>
    %120 = arith.mulf %119, %118 : vector<16x128xf32>
    %121 = math.tanh %120 : vector<16x128xf32>
    %cst_55 = arith.constant 5.000000e-01 : f32
    %122 = vector.broadcast %cst_55 : f32 to vector<16x128xf32>
    %123 = arith.mulf %122, %121 : vector<16x128xf32>
    %cst_56 = arith.constant 5.000000e-01 : f32
    %124 = vector.broadcast %cst_56 : f32 to vector<16x128xf32>
    %125 = arith.addf %123, %124 : vector<16x128xf32>
    %126 = arith.mulf %115, %89 : vector<16x128xf32>
    %127 = arith.mulf %107, %117 : vector<16x128xf32>
    %128 = arith.addf %126, %127 : vector<16x128xf32>
    %129 = math.tanh %128 : vector<16x128xf32>
    %130 = arith.mulf %125, %129 : vector<16x128xf32>
    %131 = arith.truncf %130 : vector<16x128xf32> to vector<16x128xbf16>
    %c3_i32 = arith.constant 3 : i32
    %c0_57 = arith.constant 0 : index
    %c0_58 = arith.constant 0 : index
    %132 = vector.load %arg4[%c0_57, %c0_58] : memref<128x512xbf16, #tpu.memory_space<vmem>>, vector<128x512xbf16>
    %cst_59 = arith.constant dense<0.000000e+00> : vector<16x512xf32>
    %133 = tpu.matmul %131, %132, %cst_59 {dimension_numbers = #tpu.dot_dimension_numbers<[1], [0], [0], [1], [0, 0, 1, 1], [], []>} : vector<16x128xbf16>, vector<128x512xbf16>, vector<16x512xf32> -> vector<16x512xf32>
    %134 = arith.index_cast %c3_i32 : i32 to index
    %c0_60 = arith.constant 0 : index
    %c0_61 = arith.constant 0 : index
    %135 = vector.load %arg9[%134, %c0_60, %c0_61] : memref<8x16x512xbf16, #tpu.memory_space<vmem>>, vector<1x16x512xbf16>
    %136 = vector.shape_cast %135 : vector<1x16x512xbf16> to vector<16x512xbf16>
    %137 = arith.extf %136 : vector<16x512xbf16> to vector<16x512xf32>
    %138 = arith.addf %133, %137 : vector<16x512xf32>
    %139 = vector.extract_strided_slice %138 {offsets = [0, 0], sizes = [16, 128], strides = [1, 1]} : vector<16x512xf32> to vector<16x128xf32>
    %cst_62 = arith.constant 5.000000e-01 : f32
    %140 = vector.broadcast %cst_62 : f32 to vector<16x128xf32>
    %141 = arith.mulf %140, %139 : vector<16x128xf32>
    %142 = math.tanh %141 : vector<16x128xf32>
    %cst_63 = arith.constant 5.000000e-01 : f32
    %143 = vector.broadcast %cst_63 : f32 to vector<16x128xf32>
    %144 = arith.mulf %143, %142 : vector<16x128xf32>
    %cst_64 = arith.constant 5.000000e-01 : f32
    %145 = vector.broadcast %cst_64 : f32 to vector<16x128xf32>
    %146 = arith.addf %144, %145 : vector<16x128xf32>
    %147 = vector.extract_strided_slice %138 {offsets = [0, 128], sizes = [16, 128], strides = [1, 1]} : vector<16x512xf32> to vector<16x128xf32>
    %cst_65 = arith.constant 5.000000e-01 : f32
    %148 = vector.broadcast %cst_65 : f32 to vector<16x128xf32>
    %149 = arith.mulf %148, %147 : vector<16x128xf32>
    %150 = math.tanh %149 : vector<16x128xf32>
    %cst_66 = arith.constant 5.000000e-01 : f32
    %151 = vector.broadcast %cst_66 : f32 to vector<16x128xf32>
    %152 = arith.mulf %151, %150 : vector<16x128xf32>
    %cst_67 = arith.constant 5.000000e-01 : f32
    %153 = vector.broadcast %cst_67 : f32 to vector<16x128xf32>
    %154 = arith.addf %152, %153 : vector<16x128xf32>
    %155 = vector.extract_strided_slice %138 {offsets = [0, 256], sizes = [16, 128], strides = [1, 1]} : vector<16x512xf32> to vector<16x128xf32>
    %156 = math.tanh %155 : vector<16x128xf32>
    %157 = vector.extract_strided_slice %138 {offsets = [0, 384], sizes = [16, 128], strides = [1, 1]} : vector<16x512xf32> to vector<16x128xf32>
    %cst_68 = arith.constant 5.000000e-01 : f32
    %158 = vector.broadcast %cst_68 : f32 to vector<16x128xf32>
    %159 = arith.mulf %158, %157 : vector<16x128xf32>
    %160 = math.tanh %159 : vector<16x128xf32>
    %cst_69 = arith.constant 5.000000e-01 : f32
    %161 = vector.broadcast %cst_69 : f32 to vector<16x128xf32>
    %162 = arith.mulf %161, %160 : vector<16x128xf32>
    %cst_70 = arith.constant 5.000000e-01 : f32
    %163 = vector.broadcast %cst_70 : f32 to vector<16x128xf32>
    %164 = arith.addf %162, %163 : vector<16x128xf32>
    %165 = arith.mulf %154, %128 : vector<16x128xf32>
    %166 = arith.mulf %146, %156 : vector<16x128xf32>
    %167 = arith.addf %165, %166 : vector<16x128xf32>
    %168 = math.tanh %167 : vector<16x128xf32>
    %169 = arith.mulf %164, %168 : vector<16x128xf32>
    %170 = arith.truncf %169 : vector<16x128xf32> to vector<16x128xbf16>
    %c4_i32 = arith.constant 4 : i32
    %c0_71 = arith.constant 0 : index
    %c0_72 = arith.constant 0 : index
    %171 = vector.load %arg4[%c0_71, %c0_72] : memref<128x512xbf16, #tpu.memory_space<vmem>>, vector<128x512xbf16>
    %cst_73 = arith.constant dense<0.000000e+00> : vector<16x512xf32>
    %172 = tpu.matmul %170, %171, %cst_73 {dimension_numbers = #tpu.dot_dimension_numbers<[1], [0], [0], [1], [0, 0, 1, 1], [], []>} : vector<16x128xbf16>, vector<128x512xbf16>, vector<16x512xf32> -> vector<16x512xf32>
    %173 = arith.index_cast %c4_i32 : i32 to index
    %c0_74 = arith.constant 0 : index
    %c0_75 = arith.constant 0 : index
    %174 = vector.load %arg9[%173, %c0_74, %c0_75] : memref<8x16x512xbf16, #tpu.memory_space<vmem>>, vector<1x16x512xbf16>
    %175 = vector.shape_cast %174 : vector<1x16x512xbf16> to vector<16x512xbf16>
    %176 = arith.extf %175 : vector<16x512xbf16> to vector<16x512xf32>
    %177 = arith.addf %172, %176 : vector<16x512xf32>
    %178 = vector.extract_strided_slice %177 {offsets = [0, 0], sizes = [16, 128], strides = [1, 1]} : vector<16x512xf32> to vector<16x128xf32>
    %cst_76 = arith.constant 5.000000e-01 : f32
    %179 = vector.broadcast %cst_76 : f32 to vector<16x128xf32>
    %180 = arith.mulf %179, %178 : vector<16x128xf32>
    %181 = math.tanh %180 : vector<16x128xf32>
    %cst_77 = arith.constant 5.000000e-01 : f32
    %182 = vector.broadcast %cst_77 : f32 to vector<16x128xf32>
    %183 = arith.mulf %182, %181 : vector<16x128xf32>
    %cst_78 = arith.constant 5.000000e-01 : f32
    %184 = vector.broadcast %cst_78 : f32 to vector<16x128xf32>
    %185 = arith.addf %183, %184 : vector<16x128xf32>
    %186 = vector.extract_strided_slice %177 {offsets = [0, 128], sizes = [16, 128], strides = [1, 1]} : vector<16x512xf32> to vector<16x128xf32>
    %cst_79 = arith.constant 5.000000e-01 : f32
    %187 = vector.broadcast %cst_79 : f32 to vector<16x128xf32>
    %188 = arith.mulf %187, %186 : vector<16x128xf32>
    %189 = math.tanh %188 : vector<16x128xf32>
    %cst_80 = arith.constant 5.000000e-01 : f32
    %190 = vector.broadcast %cst_80 : f32 to vector<16x128xf32>
    %191 = arith.mulf %190, %189 : vector<16x128xf32>
    %cst_81 = arith.constant 5.000000e-01 : f32
    %192 = vector.broadcast %cst_81 : f32 to vector<16x128xf32>
    %193 = arith.addf %191, %192 : vector<16x128xf32>
    %194 = vector.extract_strided_slice %177 {offsets = [0, 256], sizes = [16, 128], strides = [1, 1]} : vector<16x512xf32> to vector<16x128xf32>
    %195 = math.tanh %194 : vector<16x128xf32>
    %196 = vector.extract_strided_slice %177 {offsets = [0, 384], sizes = [16, 128], strides = [1, 1]} : vector<16x512xf32> to vector<16x128xf32>
    %cst_82 = arith.constant 5.000000e-01 : f32
    %197 = vector.broadcast %cst_82 : f32 to vector<16x128xf32>
    %198 = arith.mulf %197, %196 : vector<16x128xf32>
    %199 = math.tanh %198 : vector<16x128xf32>
    %cst_83 = arith.constant 5.000000e-01 : f32
    %200 = vector.broadcast %cst_83 : f32 to vector<16x128xf32>
    %201 = arith.mulf %200, %199 : vector<16x128xf32>
    %cst_84 = arith.constant 5.000000e-01 : f32
    %202 = vector.broadcast %cst_84 : f32 to vector<16x128xf32>
    %203 = arith.addf %201, %202 : vector<16x128xf32>
    %204 = arith.mulf %193, %167 : vector<16x128xf32>
    %205 = arith.mulf %185, %195 : vector<16x128xf32>
    %206 = arith.addf %204, %205 : vector<16x128xf32>
    %207 = math.tanh %206 : vector<16x128xf32>
    %208 = arith.mulf %203, %207 : vector<16x128xf32>
    %209 = arith.truncf %208 : vector<16x128xf32> to vector<16x128xbf16>
    %c5_i32 = arith.constant 5 : i32
    %c0_85 = arith.constant 0 : index
    %c0_86 = arith.constant 0 : index
    %210 = vector.load %arg4[%c0_85, %c0_86] : memref<128x512xbf16, #tpu.memory_space<vmem>>, vector<128x512xbf16>
    %cst_87 = arith.constant dense<0.000000e+00> : vector<16x512xf32>
    %211 = tpu.matmul %209, %210, %cst_87 {dimension_numbers = #tpu.dot_dimension_numbers<[1], [0], [0], [1], [0, 0, 1, 1], [], []>} : vector<16x128xbf16>, vector<128x512xbf16>, vector<16x512xf32> -> vector<16x512xf32>
    %212 = arith.index_cast %c5_i32 : i32 to index
    %c0_88 = arith.constant 0 : index
    %c0_89 = arith.constant 0 : index
    %213 = vector.load %arg9[%212, %c0_88, %c0_89] : memref<8x16x512xbf16, #tpu.memory_space<vmem>>, vector<1x16x512xbf16>
    %214 = vector.shape_cast %213 : vector<1x16x512xbf16> to vector<16x512xbf16>
    %215 = arith.extf %214 : vector<16x512xbf16> to vector<16x512xf32>
    %216 = arith.addf %211, %215 : vector<16x512xf32>
    %217 = vector.extract_strided_slice %216 {offsets = [0, 0], sizes = [16, 128], strides = [1, 1]} : vector<16x512xf32> to vector<16x128xf32>
    %cst_90 = arith.constant 5.000000e-01 : f32
    %218 = vector.broadcast %cst_90 : f32 to vector<16x128xf32>
    %219 = arith.mulf %218, %217 : vector<16x128xf32>
    %220 = math.tanh %219 : vector<16x128xf32>
    %cst_91 = arith.constant 5.000000e-01 : f32
    %221 = vector.broadcast %cst_91 : f32 to vector<16x128xf32>
    %222 = arith.mulf %221, %220 : vector<16x128xf32>
    %cst_92 = arith.constant 5.000000e-01 : f32
    %223 = vector.broadcast %cst_92 : f32 to vector<16x128xf32>
    %224 = arith.addf %222, %223 : vector<16x128xf32>
    %225 = vector.extract_strided_slice %216 {offsets = [0, 128], sizes = [16, 128], strides = [1, 1]} : vector<16x512xf32> to vector<16x128xf32>
    %cst_93 = arith.constant 5.000000e-01 : f32
    %226 = vector.broadcast %cst_93 : f32 to vector<16x128xf32>
    %227 = arith.mulf %226, %225 : vector<16x128xf32>
    %228 = math.tanh %227 : vector<16x128xf32>
    %cst_94 = arith.constant 5.000000e-01 : f32
    %229 = vector.broadcast %cst_94 : f32 to vector<16x128xf32>
    %230 = arith.mulf %229, %228 : vector<16x128xf32>
    %cst_95 = arith.constant 5.000000e-01 : f32
    %231 = vector.broadcast %cst_95 : f32 to vector<16x128xf32>
    %232 = arith.addf %230, %231 : vector<16x128xf32>
    %233 = vector.extract_strided_slice %216 {offsets = [0, 256], sizes = [16, 128], strides = [1, 1]} : vector<16x512xf32> to vector<16x128xf32>
    %234 = math.tanh %233 : vector<16x128xf32>
    %235 = vector.extract_strided_slice %216 {offsets = [0, 384], sizes = [16, 128], strides = [1, 1]} : vector<16x512xf32> to vector<16x128xf32>
    %cst_96 = arith.constant 5.000000e-01 : f32
    %236 = vector.broadcast %cst_96 : f32 to vector<16x128xf32>
    %237 = arith.mulf %236, %235 : vector<16x128xf32>
    %238 = math.tanh %237 : vector<16x128xf32>
    %cst_97 = arith.constant 5.000000e-01 : f32
    %239 = vector.broadcast %cst_97 : f32 to vector<16x128xf32>
    %240 = arith.mulf %239, %238 : vector<16x128xf32>
    %cst_98 = arith.constant 5.000000e-01 : f32
    %241 = vector.broadcast %cst_98 : f32 to vector<16x128xf32>
    %242 = arith.addf %240, %241 : vector<16x128xf32>
    %243 = arith.mulf %232, %206 : vector<16x128xf32>
    %244 = arith.mulf %224, %234 : vector<16x128xf32>
    %245 = arith.addf %243, %244 : vector<16x128xf32>
    %246 = math.tanh %245 : vector<16x128xf32>
    %247 = arith.mulf %242, %246 : vector<16x128xf32>
    %248 = arith.truncf %247 : vector<16x128xf32> to vector<16x128xbf16>
    %c6_i32 = arith.constant 6 : i32
    %c0_99 = arith.constant 0 : index
    %c0_100 = arith.constant 0 : index
    %249 = vector.load %arg4[%c0_99, %c0_100] : memref<128x512xbf16, #tpu.memory_space<vmem>>, vector<128x512xbf16>
    %cst_101 = arith.constant dense<0.000000e+00> : vector<16x512xf32>
    %250 = tpu.matmul %248, %249, %cst_101 {dimension_numbers = #tpu.dot_dimension_numbers<[1], [0], [0], [1], [0, 0, 1, 1], [], []>} : vector<16x128xbf16>, vector<128x512xbf16>, vector<16x512xf32> -> vector<16x512xf32>
    %251 = arith.index_cast %c6_i32 : i32 to index
    %c0_102 = arith.constant 0 : index
    %c0_103 = arith.constant 0 : index
    %252 = vector.load %arg9[%251, %c0_102, %c0_103] : memref<8x16x512xbf16, #tpu.memory_space<vmem>>, vector<1x16x512xbf16>
    %253 = vector.shape_cast %252 : vector<1x16x512xbf16> to vector<16x512xbf16>
    %254 = arith.extf %253 : vector<16x512xbf16> to vector<16x512xf32>
    %255 = arith.addf %250, %254 : vector<16x512xf32>
    %256 = vector.extract_strided_slice %255 {offsets = [0, 0], sizes = [16, 128], strides = [1, 1]} : vector<16x512xf32> to vector<16x128xf32>
    %cst_104 = arith.constant 5.000000e-01 : f32
    %257 = vector.broadcast %cst_104 : f32 to vector<16x128xf32>
    %258 = arith.mulf %257, %256 : vector<16x128xf32>
    %259 = math.tanh %258 : vector<16x128xf32>
    %cst_105 = arith.constant 5.000000e-01 : f32
    %260 = vector.broadcast %cst_105 : f32 to vector<16x128xf32>
    %261 = arith.mulf %260, %259 : vector<16x128xf32>
    %cst_106 = arith.constant 5.000000e-01 : f32
    %262 = vector.broadcast %cst_106 : f32 to vector<16x128xf32>
    %263 = arith.addf %261, %262 : vector<16x128xf32>
    %264 = vector.extract_strided_slice %255 {offsets = [0, 128], sizes = [16, 128], strides = [1, 1]} : vector<16x512xf32> to vector<16x128xf32>
    %cst_107 = arith.constant 5.000000e-01 : f32
    %265 = vector.broadcast %cst_107 : f32 to vector<16x128xf32>
    %266 = arith.mulf %265, %264 : vector<16x128xf32>
    %267 = math.tanh %266 : vector<16x128xf32>
    %cst_108 = arith.constant 5.000000e-01 : f32
    %268 = vector.broadcast %cst_108 : f32 to vector<16x128xf32>
    %269 = arith.mulf %268, %267 : vector<16x128xf32>
    %cst_109 = arith.constant 5.000000e-01 : f32
    %270 = vector.broadcast %cst_109 : f32 to vector<16x128xf32>
    %271 = arith.addf %269, %270 : vector<16x128xf32>
    %272 = vector.extract_strided_slice %255 {offsets = [0, 256], sizes = [16, 128], strides = [1, 1]} : vector<16x512xf32> to vector<16x128xf32>
    %273 = math.tanh %272 : vector<16x128xf32>
    %274 = vector.extract_strided_slice %255 {offsets = [0, 384], sizes = [16, 128], strides = [1, 1]} : vector<16x512xf32> to vector<16x128xf32>
    %cst_110 = arith.constant 5.000000e-01 : f32
    %275 = vector.broadcast %cst_110 : f32 to vector<16x128xf32>
    %276 = arith.mulf %275, %274 : vector<16x128xf32>
    %277 = math.tanh %276 : vector<16x128xf32>
    %cst_111 = arith.constant 5.000000e-01 : f32
    %278 = vector.broadcast %cst_111 : f32 to vector<16x128xf32>
    %279 = arith.mulf %278, %277 : vector<16x128xf32>
    %cst_112 = arith.constant 5.000000e-01 : f32
    %280 = vector.broadcast %cst_112 : f32 to vector<16x128xf32>
    %281 = arith.addf %279, %280 : vector<16x128xf32>
    %282 = arith.mulf %271, %245 : vector<16x128xf32>
    %283 = arith.mulf %263, %273 : vector<16x128xf32>
    %284 = arith.addf %282, %283 : vector<16x128xf32>
    %285 = math.tanh %284 : vector<16x128xf32>
    %286 = arith.mulf %281, %285 : vector<16x128xf32>
    %287 = arith.truncf %286 : vector<16x128xf32> to vector<16x128xbf16>
    %c7_i32 = arith.constant 7 : i32
    %c0_113 = arith.constant 0 : index
    %c0_114 = arith.constant 0 : index
    %288 = vector.load %arg4[%c0_113, %c0_114] : memref<128x512xbf16, #tpu.memory_space<vmem>>, vector<128x512xbf16>
    %cst_115 = arith.constant dense<0.000000e+00> : vector<16x512xf32>
    %289 = tpu.matmul %287, %288, %cst_115 {dimension_numbers = #tpu.dot_dimension_numbers<[1], [0], [0], [1], [0, 0, 1, 1], [], []>} : vector<16x128xbf16>, vector<128x512xbf16>, vector<16x512xf32> -> vector<16x512xf32>
    %290 = arith.index_cast %c7_i32 : i32 to index
    %c0_116 = arith.constant 0 : index
    %c0_117 = arith.constant 0 : index
    %291 = vector.load %arg9[%290, %c0_116, %c0_117] : memref<8x16x512xbf16, #tpu.memory_space<vmem>>, vector<1x16x512xbf16>
    %292 = vector.shape_cast %291 : vector<1x16x512xbf16> to vector<16x512xbf16>
    %293 = arith.extf %292 : vector<16x512xbf16> to vector<16x512xf32>
    %294 = arith.addf %289, %293 : vector<16x512xf32>
    %295 = vector.extract_strided_slice %294 {offsets = [0, 0], sizes = [16, 128], strides = [1, 1]} : vector<16x512xf32> to vector<16x128xf32>
    %cst_118 = arith.constant 5.000000e-01 : f32
    %296 = vector.broadcast %cst_118 : f32 to vector<16x128xf32>
    %297 = arith.mulf %296, %295 : vector<16x128xf32>
    %298 = math.tanh %297 : vector<16x128xf32>
    %cst_119 = arith.constant 5.000000e-01 : f32
    %299 = vector.broadcast %cst_119 : f32 to vector<16x128xf32>
    %300 = arith.mulf %299, %298 : vector<16x128xf32>
    %cst_120 = arith.constant 5.000000e-01 : f32
    %301 = vector.broadcast %cst_120 : f32 to vector<16x128xf32>
    %302 = arith.addf %300, %301 : vector<16x128xf32>
    %303 = vector.extract_strided_slice %294 {offsets = [0, 128], sizes = [16, 128], strides = [1, 1]} : vector<16x512xf32> to vector<16x128xf32>
    %cst_121 = arith.constant 5.000000e-01 : f32
    %304 = vector.broadcast %cst_121 : f32 to vector<16x128xf32>
    %305 = arith.mulf %304, %303 : vector<16x128xf32>
    %306 = math.tanh %305 : vector<16x128xf32>
    %cst_122 = arith.constant 5.000000e-01 : f32
    %307 = vector.broadcast %cst_122 : f32 to vector<16x128xf32>
    %308 = arith.mulf %307, %306 : vector<16x128xf32>
    %cst_123 = arith.constant 5.000000e-01 : f32
    %309 = vector.broadcast %cst_123 : f32 to vector<16x128xf32>
    %310 = arith.addf %308, %309 : vector<16x128xf32>
    %311 = vector.extract_strided_slice %294 {offsets = [0, 256], sizes = [16, 128], strides = [1, 1]} : vector<16x512xf32> to vector<16x128xf32>
    %312 = math.tanh %311 : vector<16x128xf32>
    %313 = vector.extract_strided_slice %294 {offsets = [0, 384], sizes = [16, 128], strides = [1, 1]} : vector<16x512xf32> to vector<16x128xf32>
    %cst_124 = arith.constant 5.000000e-01 : f32
    %314 = vector.broadcast %cst_124 : f32 to vector<16x128xf32>
    %315 = arith.mulf %314, %313 : vector<16x128xf32>
    %316 = math.tanh %315 : vector<16x128xf32>
    %cst_125 = arith.constant 5.000000e-01 : f32
    %317 = vector.broadcast %cst_125 : f32 to vector<16x128xf32>
    %318 = arith.mulf %317, %316 : vector<16x128xf32>
    %cst_126 = arith.constant 5.000000e-01 : f32
    %319 = vector.broadcast %cst_126 : f32 to vector<16x128xf32>
    %320 = arith.addf %318, %319 : vector<16x128xf32>
    %321 = arith.mulf %310, %284 : vector<16x128xf32>
    %322 = arith.mulf %302, %312 : vector<16x128xf32>
    %323 = arith.addf %321, %322 : vector<16x128xf32>
    %324 = math.tanh %323 : vector<16x128xf32>
    %325 = arith.mulf %320, %324 : vector<16x128xf32>
    %326 = arith.truncf %325 : vector<16x128xf32> to vector<16x128xbf16>
    %c8_i32 = arith.constant 8 : i32
    %c0_127 = arith.constant 0 : index
    %c0_128 = arith.constant 0 : index
    %327 = vector.load %arg10[%c0_127, %c0_128] : memref<16x128xbf16, #tpu.memory_space<vmem>>, vector<16x128xbf16>
    tpu.vector_store %arg10[%c0_127, %c0_128], %326 {strides = array<i32>} : memref<16x128xbf16, #tpu.memory_space<vmem>>, vector<16x128xbf16>,
    %c0_129 = arith.constant 0 : index
    %c0_130 = arith.constant 0 : index
    %328 = vector.load %arg11[%c0_129, %c0_130] : memref<16x128xf32, #tpu.memory_space<vmem>>, vector<16x128xf32>
    tpu.vector_store %arg11[%c0_129, %c0_130], %323 {strides = array<i32>} : memref<16x128xf32, #tpu.memory_space<vmem>>, vector<16x128xf32>,
    %c0_i32_131 = arith.constant 0 : i32
    %329 = arith.cmpi eq, %arg1, %c0_i32_131 : i32
    %330 = arith.extui %329 : i1 to i32
    %c0_i32_132 = arith.constant 0 : i32
    %331 = arith.cmpi ne, %330, %c0_i32_132 : i32
    scf.if %331 {
      %c0_133 = arith.constant 0 : index
      %c0_134 = arith.constant 0 : index
      %332 = vector.load %arg6[%c0_133, %c0_134] : memref<128x128xbf16, #tpu.memory_space<vmem>>, vector<128x128xbf16>
      %cst_135 = arith.constant dense<0.000000e+00> : vector<16x128xf32>
      %333 = tpu.matmul %326, %332, %cst_135 {dimension_numbers = #tpu.dot_dimension_numbers<[1], [0], [0], [1], [0, 0, 1, 1], [], []>} : vector<16x128xbf16>, vector<128x128xbf16>, vector<16x128xf32> -> vector<16x128xf32>
      %c0_136 = arith.constant 0 : index
      %c0_137 = arith.constant 0 : index
      %334 = vector.load %arg7[%c0_136, %c0_137] : memref<1x128xf32, #tpu.memory_space<vmem>>, vector<1x128xf32>
      %335 = vector.broadcast %334 : vector<1x128xf32> to vector<16x128xf32>
      %336 = arith.addf %333, %335 : vector<16x128xf32>
      %c0_138 = arith.constant 0 : index
      %c0_139 = arith.constant 0 : index
      %337 = vector.load %arg8[%c0_138, %c0_139] : memref<16x128xf32, #tpu.memory_space<vmem>>, vector<16x128xf32>
      tpu.vector_store %arg8[%c0_138, %c0_139], %336 {strides = array<i32>} : memref<16x128xf32, #tpu.memory_space<vmem>>, vector<16x128xf32>,
    } else {
    }
    return
  }
  func.func @transform_0(%arg0: i32, %arg1: i32) -> (i32, i32, i32) {
    %c0_i32 = arith.constant 0 : i32
    %c0_i32_0 = arith.constant 0 : i32
    return %arg1, %arg0, %c0_i32 : i32, i32, i32
  }
  func.func @transform_1(%arg0: i32, %arg1: i32) -> (i32, i32) {
    %c0_i32 = arith.constant 0 : i32
    %c0_i32_0 = arith.constant 0 : i32
    %c0_i32_1 = arith.constant 0 : i32
    return %c0_i32, %c0_i32_0 : i32, i32
  }
  func.func @transform_2(%arg0: i32, %arg1: i32) -> (i32, i32) {
    %c0_i32 = arith.constant 0 : i32
    %c0_i32_0 = arith.constant 0 : i32
    %c0_i32_1 = arith.constant 0 : i32
    return %c0_i32, %c0_i32_0 : i32, i32
  }
  func.func @transform_3(%arg0: i32, %arg1: i32) -> (i32, i32) {
    %c0_i32 = arith.constant 0 : i32
    %c0_i32_0 = arith.constant 0 : i32
    %c0_i32_1 = arith.constant 0 : i32
    return %c0_i32, %c0_i32_0 : i32, i32
  }
  func.func @transform_4(%arg0: i32, %arg1: i32) -> (i32, i32) {
    %c0_i32 = arith.constant 0 : i32
    %c0_i32_0 = arith.constant 0 : i32
    %c0_i32_1 = arith.constant 0 : i32
    return %c0_i32, %c0_i32_0 : i32, i32
  }
  func.func @transform_5(%arg0: i32, %arg1: i32) -> (i32, i32) {
    %c0_i32 = arith.constant 0 : i32
    %c0_i32_0 = arith.constant 0 : i32
    %c0_i32_1 = arith.constant 0 : i32
    return %c0_i32, %c0_i32_0 : i32, i32
  }
  func.func @transform_6(%arg0: i32, %arg1: i32) -> (i32, i32) {
    %c0_i32 = arith.constant 0 : i32
    %c0_i32_0 = arith.constant 0 : i32
    return %arg0, %c0_i32 : i32, i32
  }
}

</mosaic_0001>

<llo_original>
// kernel: tpu_custom_call.1
$region0: #{tpu_custom_call.1}
  #allocation0 [shape = 'u32[]', space=smem, size = 0x4, offset = 0x4, fixed_abs, tag = 'smem constant byte address 0x4 - core index']
  #allocation1 [shape = 'u32[144,128]{1,0:T(1,128)}', space=vmem, size = 0x12000, scoped, tag = 'internal scratch']
  #allocation2 [shape = 'bf16[8,16,512]{2,1,0:T(16,128)(2,1)}', space=vmem, size = 0x20000, scoped, tag = 'scratch operand']
  #allocation3 [shape = 'bf16[16,128]{1,0:T(16,128)(2,1)}', space=vmem, size = 0x1000, scoped, tag = 'scratch operand']
  #allocation4 [shape = 'f32[16,128]{1,0:T(8,128)}', space=vmem, size = 0x2000, scoped, tag = 'scratch operand']
  %s0 = inlined_call_operand.hbm [shape: bf16[8,16,128], index: 0, kind: input, shape index: {}]
  %s1 = inlined_call_operand.hbm [shape: bf16[128,512], index: 1, kind: input, shape index: {}]
  %s2 = inlined_call_operand.hbm [shape: bf16[128,512], index: 2, kind: input, shape index: {}]
  %s3 = inlined_call_operand.hbm [shape: f32[1,512], index: 3, kind: input, shape index: {}]
  %s4 = inlined_call_operand.hbm [shape: bf16[128,128], index: 4, kind: input, shape index: {}]
  %s5 = inlined_call_operand.hbm [shape: f32[1,128], index: 5, kind: input, shape index: {}]
  %s6 = inlined_call_operand.hbm [shape: f32[16,128], index: 6, kind: output, shape index: {}]
  %s7 = sld [smem:[#allocation0]]
  $region66: #{tpu_custom_call.1} parent=0
    _
  %s9 = ssub.s32 1, %s7
  %s10 = scalar_select 0, %s9, %s7
  $region1: #{tpu_custom_call.1} parent=0
    #allocation5 [shape = 'u8[32768]{0}', space=vmem, size = 0x8000, scoped, tag = 'input window, operand 0, single buffered']
    #allocation6 [shape = 's32[1]{0}', space=sflag, size = 0x4, scoped, tag = 'scoped memory for tpu_custom_call.1']
    #allocation7 [shape = 's32[1]{0}', space=sflag, size = 0x4, scoped, tag = 'scoped memory for tpu_custom_call.1']
    #allocation8 [shape = 'u8[131072]{0}', space=vmem, size = 0x20000, scoped, tag = 'input window, operand 1, single buffered']
    #allocation9 [shape = 's32[1]{0}', space=sflag, size = 0x4, scoped, tag = 'scoped memory for tpu_custom_call.1']
    #allocation10 [shape = 'u8[131072]{0}', space=vmem, size = 0x20000, scoped, tag = 'input window, operand 2, single buffered']
    #allocation11 [shape = 'u8[2048]{0}', space=vmem, size = 0x800, scoped, tag = 'input window, operand 3, single buffered']
    #allocation12 [shape = 's32[1]{0}', space=sflag, size = 0x4, scoped, tag = 'scoped memory for tpu_custom_call.1']
    #allocation13 [shape = 'u8[32768]{0}', space=vmem, size = 0x8000, scoped, tag = 'input window, operand 4, single buffered']
    #allocation14 [shape = 'u8[512]{0}', space=vmem, size = 0x400, scoped, tag = 'input window, operand 5, single buffered']
    #allocation15 [shape = 's32[1]{0}', space=sflag, size = 0x4, scoped, tag = 'scoped memory for tpu_custom_call.1']
    #allocation16 [shape = 'u8[8192]{0}', space=vmem, size = 0x2000, scoped, tag = 'output window, operand 0, single buffered']
    %11 = vsyncpa [#allocation6], 0
    %12 = vsyncpa [#allocation9], 0
    %13 = vsyncpa [#allocation12], 0
    %14 = vsyncpa [#allocation15], 0
    %15 = vsyncpa [#allocation7], 0
    // Predicated region
    $region2: #{tpu_custom_call.1} parent=1 // pred_check
      _
    $region3: #{tpu_custom_call.1} parent=1 // pred_check_branch
      %17 = sbr.rel (0) target = $region5
    $region4: #{tpu_custom_call.1} parent=1 // pred_region
      %s19 = ssub.s32 1024, 1024
      %20 = vsyncadd [#allocation6], %s19
      %s21 = sshll.u32 [#allocation5], 4
      %s22 = int_to_ptr.vmem [resolvable:$true] %s21
      %27 = dma.hbm_to_vmem [thread:$0]  %s0, 1024, %s22, [#allocation6], 64, 64, 4
    $region5: #{tpu_custom_call.1} parent=1 // pred_fallthru
      _
    // Predicated region
    $region6: #{tpu_custom_call.1} parent=1 // pred_check
      _
    $region7: #{tpu_custom_call.1} parent=1 // pred_check_branch
      %29 = sbr.rel (0) target = $region9
    $region8: #{tpu_custom_call.1} parent=1 // pred_region
      %s31 = ssub.s32 4096, 4096
      %32 = vsyncadd [#allocation9], %s31
      %s33 = sshll.u32 [#allocation8], 4
      %s34 = int_to_ptr.vmem [resolvable:$true] %s33
      %39 = dma.hbm_to_vmem [thread:$0]  %s1, 4096, %s34, [#allocation9], 256, 256, 16
    $region9: #{tpu_custom_call.1} parent=1 // pred_fallthru
      _
    // Predicated region
    $region10: #{tpu_custom_call.1} parent=1 // pred_check
      _
    $region11: #{tpu_custom_call.1} parent=1 // pred_check_branch
      %41 = sbr.rel (0) target = $region13
    $region12: #{tpu_custom_call.1} parent=1 // pred_region
      %s43 = ssub.s32 4096, 4096
      %44 = vsyncadd [#allocation9], %s43
      %s45 = sshll.u32 [#allocation10], 4
      %s46 = int_to_ptr.vmem [resolvable:$true] %s45
      %51 = dma.hbm_to_vmem [thread:$0]  %s2, 4096, %s46, [#allocation9], 256, 256, 16
    $region13: #{tpu_custom_call.1} parent=1 // pred_fallthru
      _
    // Predicated region
    $region14: #{tpu_custom_call.1} parent=1 // pred_check
      _
    $region15: #{tpu_custom_call.1} parent=1 // pred_check_branch
      %53 = sbr.rel (0) target = $region17
    $region16: #{tpu_custom_call.1} parent=1 // pred_region
      %s55 = ssub.s32 64, 64
      %56 = vsyncadd [#allocation12], %s55
      %s58 = sshll.u32 [#allocation11], 4
      %s59 = int_to_ptr.vmem [resolvable:$true] %s58
      %61 = dma.hbm_to_vmem [thread:$0]  %s3, 64, %s59, [#allocation12]
    $region17: #{tpu_custom_call.1} parent=1 // pred_fallthru
      _
    // Predicated region
    $region18: #{tpu_custom_call.1} parent=1 // pred_check
      _
    $region19: #{tpu_custom_call.1} parent=1 // pred_check_branch
      %63 = sbr.rel (0) target = $region21
    $region20: #{tpu_custom_call.1} parent=1 // pred_region
      %s65 = ssub.s32 1024, 1024
      %66 = vsyncadd [#allocation12], %s65
      %s67 = sshll.u32 [#allocation13], 4
      %s68 = int_to_ptr.vmem [resolvable:$true] %s67
      %73 = dma.hbm_to_vmem [thread:$0]  %s4, 1024, %s68, [#allocation12], 64, 64, 4
    $region21: #{tpu_custom_call.1} parent=1 // pred_fallthru
      _
    // Predicated region
    $region22: #{tpu_custom_call.1} parent=1 // pred_check
      _
    $region23: #{tpu_custom_call.1} parent=1 // pred_check_branch
      %75 = sbr.rel (0) target = $region25
    $region24: #{tpu_custom_call.1} parent=1 // pred_region
      %s77 = ssub.s32 16, 16
      %78 = vsyncadd [#allocation15], %s77
      %s80 = sshll.u32 [#allocation14], 4
      %s81 = int_to_ptr.vmem [resolvable:$true] %s80
      %83 = dma.hbm_to_vmem [thread:$0]  %s5, 16, %s81, [#allocation15]
    $region25: #{tpu_custom_call.1} parent=1 // pred_fallthru
      _
    // Predicated region
    $region26: #{tpu_custom_call.1} parent=1 // pred_check
      _
    $region27: #{tpu_custom_call.1} parent=1 // pred_check_branch
      %85 = sbr.rel (0) target = $region29
    $region28: #{tpu_custom_call.1} parent=1 // pred_region
      %86 = dma.done [#allocation6], 1024
    $region29: #{tpu_custom_call.1} parent=1 // pred_fallthru
      _
    // Predicated region
    $region30: #{tpu_custom_call.1} parent=1 // pred_check
      _
    $region31: #{tpu_custom_call.1} parent=1 // pred_check_branch
      %88 = sbr.rel (0) target = $region33
    $region32: #{tpu_custom_call.1} parent=1 // pred_region
      %89 = dma.done [#allocation9], 4096
    $region33: #{tpu_custom_call.1} parent=1 // pred_fallthru
      _
    // Predicated region
    $region34: #{tpu_custom_call.1} parent=1 // pred_check
      _
    $region35: #{tpu_custom_call.1} parent=1 // pred_check_branch
      %91 = sbr.rel (0) target = $region37
    $region36: #{tpu_custom_call.1} parent=1 // pred_region
      %92 = dma.done [#allocation9], 4096
    $region37: #{tpu_custom_call.1} parent=1 // pred_fallthru
      _
    // Predicated region
    $region38: #{tpu_custom_call.1} parent=1 // pred_check
      _
    $region39: #{tpu_custom_call.1} parent=1 // pred_check_branch
      %94 = sbr.rel (0) target = $region41
    $region40: #{tpu_custom_call.1} parent=1 // pred_region
      %95 = dma.done [#allocation12], 64
    $region41: #{tpu_custom_call.1} parent=1 // pred_fallthru
      _
    // Predicated region
    $region42: #{tpu_custom_call.1} parent=1 // pred_check
      _
    $region43: #{tpu_custom_call.1} parent=1 // pred_check_branch
      %97 = sbr.rel (0) target = $region45
    $region44: #{tpu_custom_call.1} parent=1 // pred_region
      %98 = dma.done [#allocation12], 1024
    $region45: #{tpu_custom_call.1} parent=1 // pred_fallthru
      _
    // Predicated region
    $region46: #{tpu_custom_call.1} parent=1 // pred_check
      _
    $region47: #{tpu_custom_call.1} parent=1 // pred_check_branch
      %100 = sbr.rel (0) target = $region49
    $region48: #{tpu_custom_call.1} parent=1 // pred_region
      %101 = dma.done [#allocation15], 16
    $region49: #{tpu_custom_call.1} parent=1 // pred_fallthru
      _
    %p103 = scmp.eq.s32.totalorder 0, 0
    // Predicated region
    $region50: #{tpu_custom_call.1} parent=1 // pred_check
      %p104 = pneg %p103
    $region51: #{tpu_custom_call.1} parent=1 // pred_check_branch
      %106 = sbr.rel (%p104) target = $region53
    $region52: #{tpu_custom_call.1} parent=1 // pred_region
      %107 = vst [vmem:[#allocation3] sm:$0xff] 0
      %108 = vst [vmem:[#allocation4] sm:$0xff] 0.0
      %109 = vst [vmem:[#allocation4 + $0x8] sm:$0xff] 0.0
    $region53: #{tpu_custom_call.1} parent=1 // pred_fallthru
      _
    %v110 = vld [vmem:[#allocation5] sm:$0xf]
    %v111 = vld [vmem:[#allocation5 + $0x4] sm:$0xf]
    %v112 = vld [vmem:[#allocation5 + $0x8] sm:$0xf]
    %v113 = vld [vmem:[#allocation5 + $0xc] sm:$0xf]
    %v114 = vld [vmem:[#allocation5 + $0x10] sm:$0xf]
    %v115 = vld [vmem:[#allocation5 + $0x14] sm:$0xf]
    %v116 = vld [vmem:[#allocation5 + $0x18] sm:$0xf]
    %v117 = vld [vmem:[#allocation5 + $0x1c] sm:$0xf]
    %v118 = vld [vmem:[#allocation5 + $0x20] sm:$0xf]
    %v119 = vld [vmem:[#allocation5 + $0x24] sm:$0xf]
    %v120 = vld [vmem:[#allocation5 + $0x28] sm:$0xf]
    %v121 = vld [vmem:[#allocation5 + $0x2c] sm:$0xf]
    %v122 = vld [vmem:[#allocation5 + $0x30] sm:$0xf]
    %v123 = vld [vmem:[#allocation5 + $0x34] sm:$0xf]
    %v124 = vld [vmem:[#allocation5 + $0x38] sm:$0xf]
    %v125 = vld [vmem:[#allocation5 + $0x3c] sm:$0xf]
    %v126 = vld [vmem:[#allocation8] sm:$0xff]
    %v127 = vld [vmem:[#allocation8 + $0x8] sm:$0xff]
    %v128 = vld [vmem:[#allocation8 + $0x10] sm:$0xff]
    %v129 = vld [vmem:[#allocation8 + $0x18] sm:$0xff]
    %v130 = vld [vmem:[#allocation8 + $0x20] sm:$0xff]
    %v131 = vld [vmem:[#allocation8 + $0x28] sm:$0xff]
    %v132 = vld [vmem:[#allocation8 + $0x30] sm:$0xff]
    %v133 = vld [vmem:[#allocation8 + $0x38] sm:$0xff]
    %v134 = vld [vmem:[#allocation8 + $0x40] sm:$0xff]
    %v135 = vld [vmem:[#allocation8 + $0x48] sm:$0xff]
    %v136 = vld [vmem:[#allocation8 + $0x50] sm:$0xff]
    %v137 = vld [vmem:[#allocation8 + $0x58] sm:$0xff]
    %v138 = vld [vmem:[#allocation8 + $0x60] sm:$0xff]
    %v139 = vld [vmem:[#allocation8 + $0x68] sm:$0xff]
    %v140 = vld [vmem:[#allocation8 + $0x70] sm:$0xff]
    %v141 = vld [vmem:[#allocation8 + $0x78] sm:$0xff]
    %v142 = vld [vmem:[#allocation8 + $0x80] sm:$0xff]
    %v143 = vld [vmem:[#allocation8 + $0x88] sm:$0xff]
    %v144 = vld [vmem:[#allocation8 + $0x90] sm:$0xff]
    %v145 = vld [vmem:[#allocation8 + $0x98] sm:$0xff]
    %v146 = vld [vmem:[#allocation8 + $0xa0] sm:$0xff]
    %v147 = vld [vmem:[#allocation8 + $0xa8] sm:$0xff]
    %v148 = vld [vmem:[#allocation8 + $0xb0] sm:$0xff]
    %v149 = vld [vmem:[#allocation8 + $0xb8] sm:$0xff]
    %v150 = vld [vmem:[#allocation8 + $0xc0] sm:$0xff]
    %v151 = vld [vmem:[#allocation8 + $0xc8] sm:$0xff]
    %v152 = vld [vmem:[#allocation8 + $0xd0] sm:$0xff]
    %v153 = vld [vmem:[#allocation8 + $0xd8] sm:$0xff]
    %v154 = vld [vmem:[#allocation8 + $0xe0] sm:$0xff]
    %v155 = vld [vmem:[#allocation8 + $0xe8] sm:$0xff]
    %v156 = vld [vmem:[#allocation8 + $0xf0] sm:$0xff]
    %v157 = vld [vmem:[#allocation8 + $0xf8] sm:$0xff]
    %v158 = vld [vmem:[#allocation11] sm:$0xf]
    %v160 = vlaneseq
    %v161 = vshrl.u32 %v160, 7
    %v162 = vsub.s32 0, %v161
    %v163 = vrot.slane %v158, %v162
    %v164 = vlaneseq
    %v165 = vshrl.u32 %v164, 7
    %v166 = vsub.s32 1, %v165
    %v167 = vrot.slane %v158, %v166
    %v168 = vlaneseq
    %v169 = vshrl.u32 %v168, 7
    %v170 = vsub.s32 2, %v169
    %v171 = vrot.slane %v158, %v170
    %v172 = vlaneseq
    %v173 = vshrl.u32 %v172, 7
    %v174 = vsub.s32 3, %v173
    %v175 = vrot.slane %v158, %v174
    %v196 = vunpack.c.l.b16 %v110
    %v197 = vunpack.c.l.b16 %v111
    %v198 = vunpack.c.l.b16 %v112
    %v199 = vunpack.c.l.b16 %v113
    %v200 = vunpack.c.l.b16 %v114
    %v201 = vunpack.c.l.b16 %v115
    %v202 = vunpack.c.l.b16 %v116
    %v203 = vunpack.c.l.b16 %v117
    %v204 = vunpack.c.l.b16 %v118
    %v205 = vunpack.c.l.b16 %v119
    %v206 = vunpack.c.l.b16 %v120
    %v207 = vunpack.c.l.b16 %v121
    %v208 = vunpack.c.l.b16 %v122
    %v209 = vunpack.c.l.b16 %v123
    %v210 = vunpack.c.l.b16 %v124
    %v211 = vunpack.c.l.b16 %v125
    %v212 = vpack.c.b16 %v197, %v196
    %v213 = vpack.c.b16 %v199, %v198
    %v214 = vpack.c.b16 %v201, %v200
    %v215 = vpack.c.b16 %v203, %v202
    %v216 = vpack.c.b16 %v205, %v204
    %v217 = vpack.c.b16 %v207, %v206
    %v218 = vpack.c.b16 %v209, %v208
    %v219 = vpack.c.b16 %v211, %v210
    %v260 = vunpack.c.l.b16 %v126
    %v261 = vunpack.c.h.b16 %v126
    %v262 = vunpack.c.l.b16 %v127
    %v263 = vunpack.c.h.b16 %v127
    %v264 = vunpack.c.l.b16 %v128
    %v265 = vunpack.c.h.b16 %v128
    %v266 = vunpack.c.l.b16 %v129
    %v267 = vunpack.c.h.b16 %v129
    %v268 = vunpack.c.l.b16 %v130
    %v269 = vunpack.c.h.b16 %v130
    %v270 = vunpack.c.l.b16 %v131
    %v271 = vunpack.c.h.b16 %v131
    %v272 = vunpack.c.l.b16 %v132
    %v273 = vunpack.c.h.b16 %v132
    %v274 = vunpack.c.l.b16 %v133
    %v275 = vunpack.c.h.b16 %v133
    %v276 = vunpack.c.l.b16 %v134
    %v277 = vunpack.c.h.b16 %v134
    %v278 = vunpack.c.l.b16 %v135
    %v279 = vunpack.c.h.b16 %v135
    %v280 = vunpack.c.l.b16 %v136
    %v281 = vunpack.c.h.b16 %v136
    %v282 = vunpack.c.l.b16 %v137
    %v283 = vunpack.c.h.b16 %v137
    %v284 = vunpack.c.l.b16 %v138
    %v285 = vunpack.c.h.b16 %v138
    %v286 = vunpack.c.l.b16 %v139
    %v287 = vunpack.c.h.b16 %v139
    %v288 = vunpack.c.l.b16 %v140
    %v289 = vunpack.c.h.b16 %v140
    %v290 = vunpack.c.l.b16 %v141
    %v291 = vunpack.c.h.b16 %v141
    %v292 = vunpack.c.l.b16 %v142
    %v293 = vunpack.c.h.b16 %v142
    %v294 = vunpack.c.l.b16 %v143
    %v295 = vunpack.c.h.b16 %v143
    %v296 = vunpack.c.l.b16 %v144
    %v297 = vunpack.c.h.b16 %v144
    %v298 = vunpack.c.l.b16 %v145
    %v299 = vunpack.c.h.b16 %v145
    %v300 = vunpack.c.l.b16 %v146
    %v301 = vunpack.c.h.b16 %v146
    %v302 = vunpack.c.l.b16 %v147
    %v303 = vunpack.c.h.b16 %v147
    %v304 = vunpack.c.l.b16 %v148
    %v305 = vunpack.c.h.b16 %v148
    %v306 = vunpack.c.l.b16 %v149
    %v307 = vunpack.c.h.b16 %v149
    %v308 = vunpack.c.l.b16 %v150
    %v309 = vunpack.c.h.b16 %v150
    %v310 = vunpack.c.l.b16 %v151
    %v311 = vunpack.c.h.b16 %v151
    %v312 = vunpack.c.l.b16 %v152
    %v313 = vunpack.c.h.b16 %v152
    %v314 = vunpack.c.l.b16 %v153
    %v315 = vunpack.c.h.b16 %v153
    %v316 = vunpack.c.l.b16 %v154
    %v317 = vunpack.c.h.b16 %v154
    %v318 = vunpack.c.l.b16 %v155
    %v319 = vunpack.c.h.b16 %v155
    %v320 = vunpack.c.l.b16 %v156
    %v321 = vunpack.c.h.b16 %v156
    %v322 = vunpack.c.l.b16 %v157
    %v323 = vunpack.c.h.b16 %v157
    %v324 = vpack.c.b16 %v264, %v260
    %v325 = vpack.c.b16 %v265, %v261
    %v326 = vpack.c.b16 %v266, %v262
    %v327 = vpack.c.b16 %v267, %v263
    %v328 = vpack.c.b16 %v272, %v268
    %v329 = vpack.c.b16 %v273, %v269
    %v330 = vpack.c.b16 %v274, %v270
    %v331 = vpack.c.b16 %v275, %v271
    %v332 = vpack.c.b16 %v280, %v276
    %v333 = vpack.c.b16 %v281, %v277
    %v334 = vpack.c.b16 %v282, %v278
    %v335 = vpack.c.b16 %v283, %v279
    %v336 = vpack.c.b16 %v288, %v284
    %v337 = vpack.c.b16 %v289, %v285
    %v338 = vpack.c.b16 %v290, %v286
    %v339 = vpack.c.b16 %v291, %v287
    %v340 = vpack.c.b16 %v296, %v292
    %v341 = vpack.c.b16 %v297, %v293
    %v342 = vpack.c.b16 %v298, %v294
    %v343 = vpack.c.b16 %v299, %v295
    %v344 = vpack.c.b16 %v304, %v300
    %v345 = vpack.c.b16 %v305, %v301
    %v346 = vpack.c.b16 %v306, %v302
    %v347 = vpack.c.b16 %v307, %v303
    %v348 = vpack.c.b16 %v312, %v308
    %v349 = vpack.c.b16 %v313, %v309
    %v350 = vpack.c.b16 %v314, %v310
    %v351 = vpack.c.b16 %v315, %v311
    %v352 = vpack.c.b16 %v320, %v316
    %v353 = vpack.c.b16 %v321, %v317
    %v354 = vpack.c.b16 %v322, %v318
    %v355 = vpack.c.b16 %v323, %v319
    %388 = vmatprep.subr.bf16.mxu0 %v325
    %389 = vmatpush1.bf16.msra.mxu0 %v324
    %390 = vmatprep.subr.bf16.mxu0 %v329
    %391 = vmatpush1.bf16.msra.mxu0 %v328
    %392 = vmatprep.subr.bf16.mxu0 %v333
    %393 = vmatpush1.bf16.msra.mxu0 %v332
    %394 = vmatprep.subr.bf16.mxu0 %v337
    %395 = vmatpush1.bf16.msra.mxu0 %v336
    %396 = vmatprep.subr.bf16.mxu0 %v341
    %397 = vmatpush1.bf16.msra.mxu0 %v340
    %398 = vmatprep.subr.bf16.mxu0 %v345
    %399 = vmatpush1.bf16.msra.mxu0 %v344
    %400 = vmatprep.subr.bf16.mxu0 %v349
    %401 = vmatpush1.bf16.msra.mxu0 %v348
    %402 = vmatprep.subr.bf16.mxu0 %v353
    %403 = vmatpush1.bf16.msra.mxu0 %v352
    %404 = vmatprep.subr.bf16.mxu0 0
    %405 = vmatpush1.bf16.msra.mxu0 0
    %406 = vmatprep.subr.bf16.mxu0 0
    %407 = vmatpush1.bf16.msra.mxu0 0
    %408 = vmatprep.subr.bf16.mxu0 0
    %409 = vmatpush1.bf16.msra.mxu0 0
    %410 = vmatprep.subr.bf16.mxu0 0
    %411 = vmatpush1.bf16.msra.mxu0 0
    %412 = vmatprep.subr.bf16.mxu0 0
    %413 = vmatpush1.bf16.msra.mxu0 0
    %414 = vmatprep.subr.bf16.mxu0 0
    %415 = vmatpush1.bf16.msra.mxu0 0
    %416 = vmatprep.subr.bf16.mxu0 0
    %417 = vmatpush1.bf16.msra.mxu0 0
    %418 = vmatprep.subr.bf16.mxu0 0
    %419 = vmatpush1.bf16.msra.mxu0 0
    %420 = vmatprep.mubr.bf16.mxu0 0
    %421 = vmatmul.mubr.bf16.gmra.mrb[0].mxu0 %v212
    %v422 = vpop.f32.mrb[0].mxu0
    %v423 = vadd.f32 %v163, %v422
    %v424 = vpop.f32.mrb[0].mxu0
    %v425 = vadd.f32 %v167, %v424
    %v426 = vpop.f32.mrb[0].mxu0
    %v427 = vadd.f32 %v163, %v426
    %v428 = vpop.f32.mrb[0].mxu0
    %v429 = vadd.f32 %v167, %v428
    %430 = vmatprep.mubr.bf16.mxu0 0
    %431 = vmatmul.mubr.bf16.gmra.mrb[0].mxu0 %v213
    %v432 = vpop.f32.mrb[0].mxu0
    %v433 = vadd.f32 %v163, %v432
    %v434 = vpop.f32.mrb[0].mxu0
    %v435 = vadd.f32 %v167, %v434
    %v436 = vpop.f32.mrb[0].mxu0
    %v437 = vadd.f32 %v163, %v436
    %v438 = vpop.f32.mrb[0].mxu0
    %v439 = vadd.f32 %v167, %v438
    %440 = vmatprep.mubr.bf16.mxu0 0
    %441 = vmatmul.mubr.bf16.gmra.mrb[0].mxu0 %v214
    %v442 = vpop.f32.mrb[0].mxu0
    %v443 = vadd.f32 %v163, %v442
    %v444 = vpop.f32.mrb[0].mxu0
    %v445 = vadd.f32 %v167, %v444
    %v446 = vpop.f32.mrb[0].mxu0
    %v447 = vadd.f32 %v163, %v446
    %v448 = vpop.f32.mrb[0].mxu0
    %v449 = vadd.f32 %v167, %v448
    %450 = vmatprep.mubr.bf16.mxu0 0
    %451 = vmatmul.mubr.bf16.gmra.mrb[0].mxu0 %v215
    %v452 = vpop.f32.mrb[0].mxu0
    %v453 = vadd.f32 %v163, %v452
    %v454 = vpop.f32.mrb[0].mxu0
    %v455 = vadd.f32 %v167, %v454
    %v456 = vpop.f32.mrb[0].mxu0
    %v457 = vadd.f32 %v163, %v456
    %v458 = vpop.f32.mrb[0].mxu0
    %v459 = vadd.f32 %v167, %v458
    %460 = vmatprep.mubr.bf16.mxu0 0
    %461 = vmatmul.mubr.bf16.gmra.mrb[0].mxu0 %v216
    %v462 = vpop.f32.mrb[0].mxu0
    %v463 = vadd.f32 %v163, %v462
    %v464 = vpop.f32.mrb[0].mxu0
    %v465 = vadd.f32 %v167, %v464
    %v466 = vpop.f32.mrb[0].mxu0
    %v467 = vadd.f32 %v163, %v466
    %v468 = vpop.f32.mrb[0].mxu0
    %v469 = vadd.f32 %v167, %v468
    %470 = vmatprep.mubr.bf16.mxu0 0
    %471 = vmatmul.mubr.bf16.gmra.mrb[0].mxu0 %v217
    %v472 = vpop.f32.mrb[0].mxu0
    %v473 = vadd.f32 %v163, %v472
    %v474 = vpop.f32.mrb[0].mxu0
    %v475 = vadd.f32 %v167, %v474
    %v476 = vpop.f32.mrb[0].mxu0
    %v477 = vadd.f32 %v163, %v476
    %v478 = vpop.f32.mrb[0].mxu0
    %v479 = vadd.f32 %v167, %v478
    %480 = vmatprep.mubr.bf16.mxu0 0
    %481 = vmatmul.mubr.bf16.gmra.mrb[0].mxu0 %v218
    %v482 = vpop.f32.mrb[0].mxu0
    %v483 = vadd.f32 %v163, %v482
    %v484 = vpop.f32.mrb[0].mxu0
    %v485 = vadd.f32 %v167, %v484
    %v486 = vpop.f32.mrb[0].mxu0
    %v487 = vadd.f32 %v163, %v486
    %v488 = vpop.f32.mrb[0].mxu0
    %v489 = vadd.f32 %v167, %v488
    %490 = vmatprep.mubr.bf16.mxu0 0
    %491 = vmatmul.mubr.bf16.gmra.mrb[0].mxu0 %v219
    %v492 = vpop.f32.mrb[0].mxu0
    %v493 = vadd.f32 %v163, %v492
    %v494 = vpop.f32.mrb[0].mxu0
    %v495 = vadd.f32 %v167, %v494
    %v496 = vpop.f32.mrb[0].mxu0
    %v497 = vadd.f32 %v163, %v496
    %v498 = vpop.f32.mrb[0].mxu0
    %v499 = vadd.f32 %v167, %v498
    %500 = vdwg.mxu0
    %501 = vmatprep.subr.bf16.mxu0 %v327
    %502 = vmatpush1.bf16.msra.mxu0 %v326
    %503 = vmatprep.subr.bf16.mxu0 %v331
    %504 = vmatpush1.bf16.msra.mxu0 %v330
    %505 = vmatprep.subr.bf16.mxu0 %v335
    %506 = vmatpush1.bf16.msra.mxu0 %v334
    %507 = vmatprep.subr.bf16.mxu0 %v339
    %508 = vmatpush1.bf16.msra.mxu0 %v338
    %509 = vmatprep.subr.bf16.mxu0 %v343
    %510 = vmatpush1.bf16.msra.mxu0 %v342
    %511 = vmatprep.subr.bf16.mxu0 %v347
    %512 = vmatpush1.bf16.msra.mxu0 %v346
    %513 = vmatprep.subr.bf16.mxu0 %v351
    %514 = vmatpush1.bf16.msra.mxu0 %v350
    %515 = vmatprep.subr.bf16.mxu0 %v355
    %516 = vmatpush1.bf16.msra.mxu0 %v354
    %517 = vmatprep.subr.bf16.mxu0 0
    %518 = vmatpush1.bf16.msra.mxu0 0
    %519 = vmatprep.subr.bf16.mxu0 0
    %520 = vmatpush1.bf16.msra.mxu0 0
    %521 = vmatprep.subr.bf16.mxu0 0
    %522 = vmatpush1.bf16.msra.mxu0 0
    %523 = vmatprep.subr.bf16.mxu0 0
    %524 = vmatpush1.bf16.msra.mxu0 0
    %525 = vmatprep.subr.bf16.mxu0 0
    %526 = vmatpush1.bf16.msra.mxu0 0
    %527 = vmatprep.subr.bf16.mxu0 0
    %528 = vmatpush1.bf16.msra.mxu0 0
    %529 = vmatprep.subr.bf16.mxu0 0
    %530 = vmatpush1.bf16.msra.mxu0 0
    %531 = vmatprep.subr.bf16.mxu0 0
    %532 = vmatpush1.bf16.msra.mxu0 0
    %533 = vmatprep.mubr.bf16.mxu0 0
    %534 = vmatmul.mubr.bf16.gmra.mrb[0].mxu0 %v212
    %v535 = vpop.f32.mrb[0].mxu0
    %v536 = vadd.f32 %v171, %v535
    %v537 = vpop.f32.mrb[0].mxu0
    %v538 = vadd.f32 %v175, %v537
    %v539 = vpop.f32.mrb[0].mxu0
    %v540 = vadd.f32 %v171, %v539
    %v541 = vpop.f32.mrb[0].mxu0
    %v542 = vadd.f32 %v175, %v541
    %543 = vmatprep.mubr.bf16.mxu0 0
    %544 = vmatmul.mubr.bf16.gmra.mrb[0].mxu0 %v213
    %v545 = vpop.f32.mrb[0].mxu0
    %v546 = vadd.f32 %v171, %v545
    %v547 = vpop.f32.mrb[0].mxu0
    %v548 = vadd.f32 %v175, %v547
    %v549 = vpop.f32.mrb[0].mxu0
    %v550 = vadd.f32 %v171, %v549
    %v551 = vpop.f32.mrb[0].mxu0
    %v552 = vadd.f32 %v175, %v551
    %553 = vmatprep.mubr.bf16.mxu0 0
    %554 = vmatmul.mubr.bf16.gmra.mrb[0].mxu0 %v214
    %v555 = vpop.f32.mrb[0].mxu0
    %v556 = vadd.f32 %v171, %v555
    %v557 = vpop.f32.mrb[0].mxu0
    %v558 = vadd.f32 %v175, %v557
    %v559 = vpop.f32.mrb[0].mxu0
    %v560 = vadd.f32 %v171, %v559
    %v561 = vpop.f32.mrb[0].mxu0
    %v562 = vadd.f32 %v175, %v561
    %563 = vmatprep.mubr.bf16.mxu0 0
    %564 = vmatmul.mubr.bf16.gmra.mrb[0].mxu0 %v215
    %v565 = vpop.f32.mrb[0].mxu0
    %v566 = vadd.f32 %v171, %v565
    %v567 = vpop.f32.mrb[0].mxu0
    %v568 = vadd.f32 %v175, %v567
    %v569 = vpop.f32.mrb[0].mxu0
    %v570 = vadd.f32 %v171, %v569
    %v571 = vpop.f32.mrb[0].mxu0
    %v572 = vadd.f32 %v175, %v571
    %573 = vmatprep.mubr.bf16.mxu0 0
    %574 = vmatmul.mubr.bf16.gmra.mrb[0].mxu0 %v216
    %v575 = vpop.f32.mrb[0].mxu0
    %v576 = vadd.f32 %v171, %v575
    %v577 = vpop.f32.mrb[0].mxu0
    %v578 = vadd.f32 %v175, %v577
    %v579 = vpop.f32.mrb[0].mxu0
    %v580 = vadd.f32 %v171, %v579
    %v581 = vpop.f32.mrb[0].mxu0
    %v582 = vadd.f32 %v175, %v581
    %583 = vmatprep.mubr.bf16.mxu0 0
    %584 = vmatmul.mubr.bf16.gmra.mrb[0].mxu0 %v217
    %v585 = vpop.f32.mrb[0].mxu0
    %v586 = vadd.f32 %v171, %v585
    %v587 = vpop.f32.mrb[0].mxu0
    %v588 = vadd.f32 %v175, %v587
    %v589 = vpop.f32.mrb[0].mxu0
    %v590 = vadd.f32 %v171, %v589
    %v591 = vpop.f32.mrb[0].mxu0
    %v592 = vadd.f32 %v175, %v591
    %593 = vmatprep.mubr.bf16.mxu0 0
    %594 = vmatmul.mubr.bf16.gmra.mrb[0].mxu0 %v218
    %v595 = vpop.f32.mrb[0].mxu0
    %v596 = vadd.f32 %v171, %v595
    %v597 = vpop.f32.mrb[0].mxu0
    %v598 = vadd.f32 %v175, %v597
    %v599 = vpop.f32.mrb[0].mxu0
    %v600 = vadd.f32 %v171, %v599
    %v601 = vpop.f32.mrb[0].mxu0
    %v602 = vadd.f32 %v175, %v601
    %603 = vmatprep.mubr.bf16.mxu0 0
    %604 = vmatmul.mubr.bf16.gmra.mrb[0].mxu0 %v219
    %v605 = vpop.f32.mrb[0].mxu0
    %v606 = vadd.f32 %v171, %v605
    %v607 = vpop.f32.mrb[0].mxu0
    %v608 = vadd.f32 %v175, %v607
    %v609 = vpop.f32.mrb[0].mxu0
    %v610 = vadd.f32 %v171, %v609
    %v611 = vpop.f32.mrb[0].mxu0
    %v612 = vadd.f32 %v175, %v611
    %613 = vdwg.mxu0
    %v614 = vpack.c.bf16 %v427, %v423
    %v615 = vpack.c.bf16 %v429, %v425
    %v616 = vpack.c.bf16 %v540, %v536
    %v617 = vpack.c.bf16 %v542, %v538
    %v618 = vpack.c.bf16 %v437, %v433
    %v619 = vpack.c.bf16 %v439, %v435
    %v620 = vpack.c.bf16 %v550, %v546
    %v621 = vpack.c.bf16 %v552, %v548
    %v622 = vpack.c.bf16 %v447, %v443
    %v623 = vpack.c.bf16 %v449, %v445
    %v624 = vpack.c.bf16 %v560, %v556
    %v625 = vpack.c.bf16 %v562, %v558
    %v626 = vpack.c.bf16 %v457, %v453
    %v627 = vpack.c.bf16 %v459, %v455
    %v628 = vpack.c.bf16 %v570, %v566
    %v629 = vpack.c.bf16 %v572, %v568
    %v630 = vpack.c.bf16 %v467, %v463
    %v631 = vpack.c.bf16 %v469, %v465
    %v632 = vpack.c.bf16 %v580, %v576
    %v633 = vpack.c.bf16 %v582, %v578
    %v634 = vpack.c.bf16 %v477, %v473
    %v635 = vpack.c.bf16 %v479, %v475
    %v636 = vpack.c.bf16 %v590, %v586
    %v637 = vpack.c.bf16 %v592, %v588
    %v638 = vpack.c.bf16 %v487, %v483
    %v639 = vpack.c.bf16 %v489, %v485
    %v640 = vpack.c.bf16 %v600, %v596
    %v641 = vpack.c.bf16 %v602, %v598
    %v642 = vpack.c.bf16 %v497, %v493
    %v643 = vpack.c.bf16 %v499, %v495
    %v644 = vpack.c.bf16 %v610, %v606
    %v645 = vpack.c.bf16 %v612, %v608
    %646 = vst [vmem:[#allocation2] sm:$0xff] %v614
    %647 = vst [vmem:[#allocation2 + $0x8] sm:$0xff] %v615
    %648 = vst [vmem:[#allocation2 + $0x10] sm:$0xff] %v616
    %649 = vst [vmem:[#allocation2 + $0x18] sm:$0xff] %v617
    %650 = vst [vmem:[#allocation2 + $0x20] sm:$0xff] %v618
    %651 = vst [vmem:[#allocation2 + $0x28] sm:$0xff] %v619
    %652 = vst [vmem:[#allocation2 + $0x30] sm:$0xff] %v620
    %653 = vst [vmem:[#allocation2 + $0x38] sm:$0xff] %v621
    %654 = vst [vmem:[#allocation2 + $0x40] sm:$0xff] %v622
    %655 = vst [vmem:[#allocation2 + $0x48] sm:$0xff] %v623
    %656 = vst [vmem:[#allocation2 + $0x50] sm:$0xff] %v624
    %657 = vst [vmem:[#allocation2 + $0x58] sm:$0xff] %v625
    %658 = vst [vmem:[#allocation2 + $0x60] sm:$0xff] %v626
    %659 = vst [vmem:[#allocation2 + $0x68] sm:$0xff] %v627
    %660 = vst [vmem:[#allocation2 + $0x70] sm:$0xff] %v628
    %661 = vst [vmem:[#allocation2 + $0x78] sm:$0xff] %v629
    %662 = vst [vmem:[#allocation2 + $0x80] sm:$0xff] %v630
    %663 = vst [vmem:[#allocation2 + $0x88] sm:$0xff] %v631
    %664 = vst [vmem:[#allocation2 + $0x90] sm:$0xff] %v632
    %665 = vst [vmem:[#allocation2 + $0x98] sm:$0xff] %v633
    %666 = vst [vmem:[#allocation2 + $0xa0] sm:$0xff] %v634
    %667 = vst [vmem:[#allocation2 + $0xa8] sm:$0xff] %v635
    %668 = vst [vmem:[#allocation2 + $0xb0] sm:$0xff] %v636
    %669 = vst [vmem:[#allocation2 + $0xb8] sm:$0xff] %v637
    %670 = vst [vmem:[#allocation2 + $0xc0] sm:$0xff] %v638
    %671 = vst [vmem:[#allocation2 + $0xc8] sm:$0xff] %v639
    %672 = vst [vmem:[#allocation2 + $0xd0] sm:$0xff] %v640
    %673 = vst [vmem:[#allocation2 + $0xd8] sm:$0xff] %v641
    %674 = vst [vmem:[#allocation2 + $0xe0] sm:$0xff] %v642
    %675 = vst [vmem:[#allocation2 + $0xe8] sm:$0xff] %v643
    %676 = vst [vmem:[#allocation2 + $0xf0] sm:$0xff] %v644
    %677 = vst [vmem:[#allocation2 + $0xf8] sm:$0xff] %v645
    %v678 = vld [vmem:[#allocation3] sm:$0xff]
    %v679 = vld [vmem:[#allocation4] sm:$0xff]
    %v680 = vld [vmem:[#allocation4 + $0x8] sm:$0xff]
    %v681 = vld [vmem:[#allocation10] sm:$0xff]
    %v682 = vld [vmem:[#allocation10 + $0x8] sm:$0xff]
    %v683 = vld [vmem:[#allocation10 + $0x10] sm:$0xff]
    %v684 = vld [vmem:[#allocation10 + $0x18] sm:$0xff]
    %v685 = vld [vmem:[#allocation10 + $0x20] sm:$0xff]
    %v686 = vld [vmem:[#allocation10 + $0x28] sm:$0xff]
    %v687 = vld [vmem:[#allocation10 + $0x30] sm:$0xff]
    %v688 = vld [vmem:[#allocation10 + $0x38] sm:$0xff]
    %v689 = vld [vmem:[#allocation10 + $0x40] sm:$0xff]
    %v690 = vld [vmem:[#allocation10 + $0x48] sm:$0xff]
    %v691 = vld [vmem:[#allocation10 + $0x50] sm:$0xff]
    %v692 = vld [vmem:[#allocation10 + $0x58] sm:$0xff]
    %v693 = vld [vmem:[#allocation10 + $0x60] sm:$0xff]
    %v694 = vld [vmem:[#allocation10 + $0x68] sm:$0xff]
    %v695 = vld [vmem:[#allocation10 + $0x70] sm:$0xff]
    %v696 = vld [vmem:[#allocation10 + $0x78] sm:$0xff]
    %v697 = vld [vmem:[#allocation10 + $0x80] sm:$0xff]
    %v698 = vld [vmem:[#allocation10 + $0x88] sm:$0xff]
    %v699 = vld [vmem:[#allocation10 + $0x90] sm:$0xff]
    %v700 = vld [vmem:[#allocation10 + $0x98] sm:$0xff]
    %v701 = vld [vmem:[#allocation10 + $0xa0] sm:$0xff]
    %v702 = vld [vmem:[#allocation10 + $0xa8] sm:$0xff]
    %v703 = vld [vmem:[#allocation10 + $0xb0] sm:$0xff]
    %v704 = vld [vmem:[#allocation10 + $0xb8] sm:$0xff]
    %v705 = vld [vmem:[#allocation10 + $0xc0] sm:$0xff]
    %v706 = vld [vmem:[#allocation10 + $0xc8] sm:$0xff]
    %v707 = vld [vmem:[#allocation10 + $0xd0] sm:$0xff]
    %v708 = vld [vmem:[#allocation10 + $0xd8] sm:$0xff]
    %v709 = vld [vmem:[#allocation10 + $0xe0] sm:$0xff]
    %v710 = vld [vmem:[#allocation10 + $0xe8] sm:$0xff]
    %v711 = vld [vmem:[#allocation10 + $0xf0] sm:$0xff]
    %v712 = vld [vmem:[#allocation10 + $0xf8] sm:$0xff]
    %v713 = vld [vmem:[#allocation2] sm:$0xff]
    %v714 = vld [vmem:[#allocation2 + $0x8] sm:$0xff]
    %v715 = vld [vmem:[#allocation2 + $0x10] sm:$0xff]
    %v716 = vld [vmem:[#allocation2 + $0x18] sm:$0xff]
    %v717 = vunpack.c.l.bf16 %v713
    %v718 = vunpack.c.l.bf16 %v714
    %v719 = vunpack.c.l.bf16 %v715
    %v720 = vunpack.c.l.bf16 %v716
    %v721 = vunpack.c.h.bf16 %v713
    %v722 = vunpack.c.h.bf16 %v714
    %v723 = vunpack.c.h.bf16 %v715
    %v724 = vunpack.c.h.bf16 %v716
    %v757 = vunpack.c.l.b16 %v681
    %v758 = vunpack.c.h.b16 %v681
    %v759 = vunpack.c.l.b16 %v682
    %v760 = vunpack.c.h.b16 %v682
    %v761 = vunpack.c.l.b16 %v683
    %v762 = vunpack.c.h.b16 %v683
    %v763 = vunpack.c.l.b16 %v684
    %v764 = vunpack.c.h.b16 %v684
    %v765 = vunpack.c.l.b16 %v685
    %v766 = vunpack.c.h.b16 %v685
    %v767 = vunpack.c.l.b16 %v686
    %v768 = vunpack.c.h.b16 %v686
    %v769 = vunpack.c.l.b16 %v687
    %v770 = vunpack.c.h.b16 %v687
    %v771 = vunpack.c.l.b16 %v688
    %v772 = vunpack.c.h.b16 %v688
    %v773 = vunpack.c.l.b16 %v689
    %v774 = vunpack.c.h.b16 %v689
    %v775 = vunpack.c.l.b16 %v690
    %v776 = vunpack.c.h.b16 %v690
    %v777 = vunpack.c.l.b16 %v691
    %v778 = vunpack.c.h.b16 %v691
    %v779 = vunpack.c.l.b16 %v692
    %v780 = vunpack.c.h.b16 %v692
    %v781 = vunpack.c.l.b16 %v693
    %v782 = vunpack.c.h.b16 %v693
    %v783 = vunpack.c.l.b16 %v694
    %v784 = vunpack.c.h.b16 %v694
    %v785 = vunpack.c.l.b16 %v695
    %v786 = vunpack.c.h.b16 %v695
    %v787 = vunpack.c.l.b16 %v696
    %v788 = vunpack.c.h.b16 %v696
    %v789 = vunpack.c.l.b16 %v697
    %v790 = vunpack.c.h.b16 %v697
    %v791 = vunpack.c.l.b16 %v698
    %v792 = vunpack.c.h.b16 %v698
    %v793 = vunpack.c.l.b16 %v699
    %v794 = vunpack.c.h.b16 %v699
    %v795 = vunpack.c.l.b16 %v700
    %v796 = vunpack.c.h.b16 %v700
    %v797 = vunpack.c.l.b16 %v701
    %v798 = vunpack.c.h.b16 %v701
    %v799 = vunpack.c.l.b16 %v702
    %v800 = vunpack.c.h.b16 %v702
    %v801 = vunpack.c.l.b16 %v703
    %v802 = vunpack.c.h.b16 %v703
    %v803 = vunpack.c.l.b16 %v704
    %v804 = vunpack.c.h.b16 %v704
    %v805 = vunpack.c.l.b16 %v705
    %v806 = vunpack.c.h.b16 %v705
    %v807 = vunpack.c.l.b16 %v706
    %v808 = vunpack.c.h.b16 %v706
    %v809 = vunpack.c.l.b16 %v707
    %v810 = vunpack.c.h.b16 %v707
    %v811 = vunpack.c.l.b16 %v708
    %v812 = vunpack.c.h.b16 %v708
    %v813 = vunpack.c.l.b16 %v709
    %v814 = vunpack.c.h.b16 %v709
    %v815 = vunpack.c.l.b16 %v710
    %v816 = vunpack.c.h.b16 %v710
    %v817 = vunpack.c.l.b16 %v711
    %v818 = vunpack.c.h.b16 %v711
    %v819 = vunpack.c.l.b16 %v712
    %v820 = vunpack.c.h.b16 %v712
    %v821 = vpack.c.b16 %v761, %v757
    %v822 = vpack.c.b16 %v762, %v758
    %v823 = vpack.c.b16 %v763, %v759
    %v824 = vpack.c.b16 %v764, %v760
    %v825 = vpack.c.b16 %v769, %v765
    %v826 = vpack.c.b16 %v770, %v766
    %v827 = vpack.c.b16 %v771, %v767
    %v828 = vpack.c.b16 %v772, %v768
    %v829 = vpack.c.b16 %v777, %v773
    %v830 = vpack.c.b16 %v778, %v774
    %v831 = vpack.c.b16 %v779, %v775
    %v832 = vpack.c.b16 %v780, %v776
    %v833 = vpack.c.b16 %v785, %v781
    %v834 = vpack.c.b16 %v786, %v782
    %v835 = vpack.c.b16 %v787, %v783
    %v836 = vpack.c.b16 %v788, %v784
    %v837 = vpack.c.b16 %v793, %v789
    %v838 = vpack.c.b16 %v794, %v790
    %v839 = vpack.c.b16 %v795, %v791
    %v840 = vpack.c.b16 %v796, %v792
    %v841 = vpack.c.b16 %v801, %v797
    %v842 = vpack.c.b16 %v802, %v798
    %v843 = vpack.c.b16 %v803, %v799
    %v844 = vpack.c.b16 %v804, %v800
    %v845 = vpack.c.b16 %v809, %v805
    %v846 = vpack.c.b16 %v810, %v806
    %v847 = vpack.c.b16 %v811, %v807
    %v848 = vpack.c.b16 %v812, %v808
    %v849 = vpack.c.b16 %v817, %v813
    %v850 = vpack.c.b16 %v818, %v814
    %v851 = vpack.c.b16 %v819, %v815
    %v852 = vpack.c.b16 %v820, %v816
    %885 = vmatprep.subr.bf16.mxu0 %v822
    %886 = vmatpush1.bf16.msra.mxu0 %v821
    %887 = vmatprep.subr.bf16.mxu0 %v826
    %888 = vmatpush1.bf16.msra.mxu0 %v825
    %889 = vmatprep.subr.bf16.mxu0 %v830
    %890 = vmatpush1.bf16.msra.mxu0 %v829
    %891 = vmatprep.subr.bf16.mxu0 %v834
    %892 = vmatpush1.bf16.msra.mxu0 %v833
    %893 = vmatprep.subr.bf16.mxu0 %v838
    %894 = vmatpush1.bf16.msra.mxu0 %v837
    %895 = vmatprep.subr.bf16.mxu0 %v842
    %896 = vmatpush1.bf16.msra.mxu0 %v841
    %897 = vmatprep.subr.bf16.mxu0 %v846
    %898 = vmatpush1.bf16.msra.mxu0 %v845
    %899 = vmatprep.subr.bf16.mxu0 %v850
    %900 = vmatpush1.bf16.msra.mxu0 %v849
    %901 = vmatprep.subr.bf16.mxu0 0
    %902 = vmatpush1.bf16.msra.mxu0 0
    %903 = vmatprep.subr.bf16.mxu0 0
    %904 = vmatpush1.bf16.msra.mxu0 0
    %905 = vmatprep.subr.bf16.mxu0 0
    %906 = vmatpush1.bf16.msra.mxu0 0
    %907 = vmatprep.subr.bf16.mxu0 0
    %908 = vmatpush1.bf16.msra.mxu0 0
    %909 = vmatprep.subr.bf16.mxu0 0
    %910 = vmatpush1.bf16.msra.mxu0 0
    %911 = vmatprep.subr.bf16.mxu0 0
    %912 = vmatpush1.bf16.msra.mxu0 0
    %913 = vmatprep.subr.bf16.mxu0 0
    %914 = vmatpush1.bf16.msra.mxu0 0
    %915 = vmatprep.subr.bf16.mxu0 0
    %916 = vmatpush1.bf16.msra.mxu0 0
    %917 = vmatprep.mubr.bf16.mxu0 0
    %918 = vmatmul.mubr.bf16.gmra.mrb[0].mxu0 %v678
    %v919 = vpop.f32.mrb[0].mxu0
    %v920 = vadd.f32 %v717, %v919
    %v921 = vpop.f32.mrb[0].mxu0
    %v922 = vadd.f32 %v718, %v921
    %v923 = vpop.f32.mrb[0].mxu0
    %v924 = vadd.f32 %v721, %v923
    %v925 = vpop.f32.mrb[0].mxu0
    %v926 = vadd.f32 %v722, %v925
    %927 = vdwg.mxu0
    %928 = vmatprep.subr.bf16.mxu0 %v824
    %929 = vmatpush1.bf16.msra.mxu0 %v823
    %930 = vmatprep.subr.bf16.mxu0 %v828
    %931 = vmatpush1.bf16.msra.mxu0 %v827
    %932 = vmatprep.subr.bf16.mxu0 %v832
    %933 = vmatpush1.bf16.msra.mxu0 %v831
    %934 = vmatprep.subr.bf16.mxu0 %v836
    %935 = vmatpush1.bf16.msra.mxu0 %v835
    %936 = vmatprep.subr.bf16.mxu0 %v840
    %937 = vmatpush1.bf16.msra.mxu0 %v839
    %938 = vmatprep.subr.bf16.mxu0 %v844
    %939 = vmatpush1.bf16.msra.mxu0 %v843
    %940 = vmatprep.subr.bf16.mxu0 %v848
    %941 = vmatpush1.bf16.msra.mxu0 %v847
    %942 = vmatprep.subr.bf16.mxu0 %v852
    %943 = vmatpush1.bf16.msra.mxu0 %v851
    %944 = vmatprep.subr.bf16.mxu0 0
    %945 = vmatpush1.bf16.msra.mxu0 0
    %946 = vmatprep.subr.bf16.mxu0 0
    %947 = vmatpush1.bf16.msra.mxu0 0
    %948 = vmatprep.subr.bf16.mxu0 0
    %949 = vmatpush1.bf16.msra.mxu0 0
    %950 = vmatprep.subr.bf16.mxu0 0
    %951 = vmatpush1.bf16.msra.mxu0 0
    %952 = vmatprep.subr.bf16.mxu0 0
    %953 = vmatpush1.bf16.msra.mxu0 0
    %954 = vmatprep.subr.bf16.mxu0 0
    %955 = vmatpush1.bf16.msra.mxu0 0
    %956 = vmatprep.subr.bf16.mxu0 0
    %957 = vmatpush1.bf16.msra.mxu0 0
    %958 = vmatprep.subr.bf16.mxu0 0
    %959 = vmatpush1.bf16.msra.mxu0 0
    %960 = vmatprep.mubr.bf16.mxu0 0
    %961 = vmatmul.mubr.bf16.gmra.mrb[0].mxu0 %v678
    %v962 = vpop.f32.mrb[0].mxu0
    %v963 = vadd.f32 %v719, %v962
    %v964 = vpop.f32.mrb[0].mxu0
    %v965 = vadd.f32 %v720, %v964
    %v966 = vpop.f32.mrb[0].mxu0
    %v967 = vadd.f32 %v723, %v966
    %v968 = vpop.f32.mrb[0].mxu0
    %v969 = vadd.f32 %v724, %v968
    %970 = vdwg.mxu0
    %v971 = vmul.f32 %v920, 0.5
    %v972 = vmul.f32 %v924, 0.5
    %v973 = vtanh.pop %v971
    %v974 = vtanh.pop %v972
    %v975 = vmul.f32 %v973, 0.5
    %v976 = vmul.f32 %v974, 0.5
    %v977 = vadd.f32 %v975, 0.5
    %v978 = vadd.f32 %v976, 0.5
    %v979 = vmul.f32 %v922, 0.5
    %v980 = vmul.f32 %v926, 0.5
    %v981 = vtanh.pop %v979
    %v982 = vtanh.pop %v980
    %v983 = vmul.f32 %v981, 0.5
    %v984 = vmul.f32 %v982, 0.5
    %v985 = vadd.f32 %v983, 0.5
    %v986 = vadd.f32 %v984, 0.5
    %v987 = vtanh.pop %v963
    %v988 = vtanh.pop %v967
    %v989 = vmul.f32 %v965, 0.5
    %v990 = vmul.f32 %v969, 0.5
    %v991 = vtanh.pop %v989
    %v992 = vtanh.pop %v990
    %v993 = vmul.f32 %v991, 0.5
    %v994 = vmul.f32 %v992, 0.5
    %v995 = vadd.f32 %v993, 0.5
    %v996 = vadd.f32 %v994, 0.5
    %v997 = vmul.f32 %v985, %v679
    %v998 = vmul.f32 %v986, %v680
    %v999 = vmul.f32 %v977, %v987
    %v1000 = vmul.f32 %v978, %v988
    %v1001 = vadd.f32 %v997, %v999
    %v1002 = vadd.f32 %v998, %v1000
    %v1003 = vtanh.pop %v1001
    %v1004 = vtanh.pop %v1002
    %v1005 = vmul.f32 %v995, %v1003
    %v1006 = vmul.f32 %v996, %v1004
    %v1007 = vpack.c.bf16 %v1006, %v1005
    %s1008 = scalar_lea.vmem [#allocation2], 32
    %v1009 = vld [vmem:[%s1008] sm:$0xff]
    %v1010 = vld [vmem:[%s1008 + $0x8] sm:$0xff]
    %v1011 = vld [vmem:[%s1008 + $0x10] sm:$0xff]
    %v1012 = vld [vmem:[%s1008 + $0x18] sm:$0xff]
    %v1013 = vunpack.c.l.bf16 %v1009
    %v1014 = vunpack.c.l.bf16 %v1010
    %v1015 = vunpack.c.l.bf16 %v1011
    %v1016 = vunpack.c.l.bf16 %v1012
    %v1017 = vunpack.c.h.bf16 %v1009
    %v1018 = vunpack.c.h.bf16 %v1010
    %v1019 = vunpack.c.h.bf16 %v1011
    %v1020 = vunpack.c.h.bf16 %v1012
    %1021 = vmatprep.subr.bf16.mxu0 %v822
    %1022 = vmatpush1.bf16.msra.mxu0 %v821
    %1023 = vmatprep.subr.bf16.mxu0 %v826
    %1024 = vmatpush1.bf16.msra.mxu0 %v825
    %1025 = vmatprep.subr.bf16.mxu0 %v830
    %1026 = vmatpush1.bf16.msra.mxu0 %v829
    %1027 = vmatprep.subr.bf16.mxu0 %v834
    %1028 = vmatpush1.bf16.msra.mxu0 %v833
    %1029 = vmatprep.subr.bf16.mxu0 %v838
    %1030 = vmatpush1.bf16.msra.mxu0 %v837
    %1031 = vmatprep.subr.bf16.mxu0 %v842
    %1032 = vmatpush1.bf16.msra.mxu0 %v841
    %1033 = vmatprep.subr.bf16.mxu0 %v846
    %1034 = vmatpush1.bf16.msra.mxu0 %v845
    %1035 = vmatprep.subr.bf16.mxu0 %v850
    %1036 = vmatpush1.bf16.msra.mxu0 %v849
    %1037 = vmatprep.subr.bf16.mxu0 0
    %1038 = vmatpush1.bf16.msra.mxu0 0
    %1039 = vmatprep.subr.bf16.mxu0 0
    %1040 = vmatpush1.bf16.msra.mxu0 0
    %1041 = vmatprep.subr.bf16.mxu0 0
    %1042 = vmatpush1.bf16.msra.mxu0 0
    %1043 = vmatprep.subr.bf16.mxu0 0
    %1044 = vmatpush1.bf16.msra.mxu0 0
    %1045 = vmatprep.subr.bf16.mxu0 0
    %1046 = vmatpush1.bf16.msra.mxu0 0
    %1047 = vmatprep.subr.bf16.mxu0 0
    %1048 = vmatpush1.bf16.msra.mxu0 0
    %1049 = vmatprep.subr.bf16.mxu0 0
    %1050 = vmatpush1.bf16.msra.mxu0 0
    %1051 = vmatprep.subr.bf16.mxu0 0
    %1052 = vmatpush1.bf16.msra.mxu0 0
    %1053 = vmatprep.mubr.bf16.mxu0 0
    %1054 = vmatmul.mubr.bf16.gmra.mrb[0].mxu0 %v1007
    %v1055 = vpop.f32.mrb[0].mxu0
    %v1056 = vadd.f32 %v1013, %v1055
    %v1057 = vpop.f32.mrb[0].mxu0
    %v1058 = vadd.f32 %v1014, %v1057
    %v1059 = vpop.f32.mrb[0].mxu0
    %v1060 = vadd.f32 %v1017, %v1059
    %v1061 = vpop.f32.mrb[0].mxu0
    %v1062 = vadd.f32 %v1018, %v1061
    %1063 = vdwg.mxu0
    %1064 = vmatprep.subr.bf16.mxu0 %v824
    %1065 = vmatpush1.bf16.msra.mxu0 %v823
    %1066 = vmatprep.subr.bf16.mxu0 %v828
    %1067 = vmatpush1.bf16.msra.mxu0 %v827
    %1068 = vmatprep.subr.bf16.mxu0 %v832
    %1069 = vmatpush1.bf16.msra.mxu0 %v831
    %1070 = vmatprep.subr.bf16.mxu0 %v836
    %1071 = vmatpush1.bf16.msra.mxu0 %v835
    %1072 = vmatprep.subr.bf16.mxu0 %v840
    %1073 = vmatpush1.bf16.msra.mxu0 %v839
    %1074 = vmatprep.subr.bf16.mxu0 %v844
    %1075 = vmatpush1.bf16.msra.mxu0 %v843
    %1076 = vmatprep.subr.bf16.mxu0 %v848
    %1077 = vmatpush1.bf16.msra.mxu0 %v847
    %1078 = vmatprep.subr.bf16.mxu0 %v852
    %1079 = vmatpush1.bf16.msra.mxu0 %v851
    %1080 = vmatprep.subr.bf16.mxu0 0
    %1081 = vmatpush1.bf16.msra.mxu0 0
    %1082 = vmatprep.subr.bf16.mxu0 0
    %1083 = vmatpush1.bf16.msra.mxu0 0
    %1084 = vmatprep.subr.bf16.mxu0 0
    %1085 = vmatpush1.bf16.msra.mxu0 0
    %1086 = vmatprep.subr.bf16.mxu0 0
    %1087 = vmatpush1.bf16.msra.mxu0 0
    %1088 = vmatprep.subr.bf16.mxu0 0
    %1089 = vmatpush1.bf16.msra.mxu0 0
    %1090 = vmatprep.subr.bf16.mxu0 0
    %1091 = vmatpush1.bf16.msra.mxu0 0
    %1092 = vmatprep.subr.bf16.mxu0 0
    %1093 = vmatpush1.bf16.msra.mxu0 0
    %1094 = vmatprep.subr.bf16.mxu0 0
    %1095 = vmatpush1.bf16.msra.mxu0 0
    %1096 = vmatprep.mubr.bf16.mxu0 0
    %1097 = vmatmul.mubr.bf16.gmra.mrb[0].mxu0 %v1007
    %v1098 = vpop.f32.mrb[0].mxu0
    %v1099 = vadd.f32 %v1015, %v1098
    %v1100 = vpop.f32.mrb[0].mxu0
    %v1101 = vadd.f32 %v1016, %v1100
    %v1102 = vpop.f32.mrb[0].mxu0
    %v1103 = vadd.f32 %v1019, %v1102
    %v1104 = vpop.f32.mrb[0].mxu0
    %v1105 = vadd.f32 %v1020, %v1104
    %1106 = vdwg.mxu0
    %v1107 = vmul.f32 %v1056, 0.5
    %v1108 = vmul.f32 %v1060, 0.5
    %v1109 = vtanh.pop %v1107
    %v1110 = vtanh.pop %v1108
    %v1111 = vmul.f32 %v1109, 0.5
    %v1112 = vmul.f32 %v1110, 0.5
    %v1113 = vadd.f32 %v1111, 0.5
    %v1114 = vadd.f32 %v1112, 0.5
    %v1115 = vmul.f32 %v1058, 0.5
    %v1116 = vmul.f32 %v1062, 0.5
    %v1117 = vtanh.pop %v1115
    %v1118 = vtanh.pop %v1116
    %v1119 = vmul.f32 %v1117, 0.5
    %v1120 = vmul.f32 %v1118, 0.5
    %v1121 = vadd.f32 %v1119, 0.5
    %v1122 = vadd.f32 %v1120, 0.5
    %v1123 = vtanh.pop %v1099
    %v1124 = vtanh.pop %v1103
    %v1125 = vmul.f32 %v1101, 0.5
    %v1126 = vmul.f32 %v1105, 0.5
    %v1127 = vtanh.pop %v1125
    %v1128 = vtanh.pop %v1126
    %v1129 = vmul.f32 %v1127, 0.5
    %v1130 = vmul.f32 %v1128, 0.5
    %v1131 = vadd.f32 %v1129, 0.5
    %v1132 = vadd.f32 %v1130, 0.5
    %v1133 = vmul.f32 %v1121, %v1001
    %v1134 = vmul.f32 %v1122, %v1002
    %v1135 = vmul.f32 %v1113, %v1123
    %v1136 = vmul.f32 %v1114, %v1124
    %v1137 = vadd.f32 %v1133, %v1135
    %v1138 = vadd.f32 %v1134, %v1136
    %v1139 = vtanh.pop %v1137
    %v1140 = vtanh.pop %v1138
    %v1141 = vmul.f32 %v1131, %v1139
    %v1142 = vmul.f32 %v1132, %v1140
    %v1143 = vpack.c.bf16 %v1142, %v1141
    %s1144 = scalar_lea.vmem [#allocation2], 64
    %v1145 = vld [vmem:[%s1144] sm:$0xff]
    %v1146 = vld [vmem:[%s1144 + $0x8] sm:$0xff]
    %v1147 = vld [vmem:[%s1144 + $0x10] sm:$0xff]
    %v1148 = vld [vmem:[%s1144 + $0x18] sm:$0xff]
    %v1149 = vunpack.c.l.bf16 %v1145
    %v1150 = vunpack.c.l.bf16 %v1146
    %v1151 = vunpack.c.l.bf16 %v1147
    %v1152 = vunpack.c.l.bf16 %v1148
    %v1153 = vunpack.c.h.bf16 %v1145
    %v1154 = vunpack.c.h.bf16 %v1146
    %v1155 = vunpack.c.h.bf16 %v1147
    %v1156 = vunpack.c.h.bf16 %v1148
    %1157 = vmatprep.subr.bf16.mxu0 %v822
    %1158 = vmatpush1.bf16.msra.mxu0 %v821
    %1159 = vmatprep.subr.bf16.mxu0 %v826
    %1160 = vmatpush1.bf16.msra.mxu0 %v825
    %1161 = vmatprep.subr.bf16.mxu0 %v830
    %1162 = vmatpush1.bf16.msra.mxu0 %v829
    %1163 = vmatprep.subr.bf16.mxu0 %v834
    %1164 = vmatpush1.bf16.msra.mxu0 %v833
    %1165 = vmatprep.subr.bf16.mxu0 %v838
    %1166 = vmatpush1.bf16.msra.mxu0 %v837
    %1167 = vmatprep.subr.bf16.mxu0 %v842
    %1168 = vmatpush1.bf16.msra.mxu0 %v841
    %1169 = vmatprep.subr.bf16.mxu0 %v846
    %1170 = vmatpush1.bf16.msra.mxu0 %v845
    %1171 = vmatprep.subr.bf16.mxu0 %v850
    %1172 = vmatpush1.bf16.msra.mxu0 %v849
    %1173 = vmatprep.subr.bf16.mxu0 0
    %1174 = vmatpush1.bf16.msra.mxu0 0
    %1175 = vmatprep.subr.bf16.mxu0 0
    %1176 = vmatpush1.bf16.msra.mxu0 0
    %1177 = vmatprep.subr.bf16.mxu0 0
    %1178 = vmatpush1.bf16.msra.mxu0 0
    %1179 = vmatprep.subr.bf16.mxu0 0
    %1180 = vmatpush1.bf16.msra.mxu0 0
    %1181 = vmatprep.subr.bf16.mxu0 0
    %1182 = vmatpush1.bf16.msra.mxu0 0
    %1183 = vmatprep.subr.bf16.mxu0 0
    %1184 = vmatpush1.bf16.msra.mxu0 0
    %1185 = vmatprep.subr.bf16.mxu0 0
    %1186 = vmatpush1.bf16.msra.mxu0 0
    %1187 = vmatprep.subr.bf16.mxu0 0
    %1188 = vmatpush1.bf16.msra.mxu0 0
    %1189 = vmatprep.mubr.bf16.mxu0 0
    %1190 = vmatmul.mubr.bf16.gmra.mrb[0].mxu0 %v1143
    %v1191 = vpop.f32.mrb[0].mxu0
    %v1192 = vadd.f32 %v1149, %v1191
    %v1193 = vpop.f32.mrb[0].mxu0
    %v1194 = vadd.f32 %v1150, %v1193
    %v1195 = vpop.f32.mrb[0].mxu0
    %v1196 = vadd.f32 %v1153, %v1195
    %v1197 = vpop.f32.mrb[0].mxu0
    %v1198 = vadd.f32 %v1154, %v1197
    %1199 = vdwg.mxu0
    %1200 = vmatprep.subr.bf16.mxu0 %v824
    %1201 = vmatpush1.bf16.msra.mxu0 %v823
    %1202 = vmatprep.subr.bf16.mxu0 %v828
    %1203 = vmatpush1.bf16.msra.mxu0 %v827
    %1204 = vmatprep.subr.bf16.mxu0 %v832
    %1205 = vmatpush1.bf16.msra.mxu0 %v831
    %1206 = vmatprep.subr.bf16.mxu0 %v836
    %1207 = vmatpush1.bf16.msra.mxu0 %v835
    %1208 = vmatprep.subr.bf16.mxu0 %v840
    %1209 = vmatpush1.bf16.msra.mxu0 %v839
    %1210 = vmatprep.subr.bf16.mxu0 %v844
    %1211 = vmatpush1.bf16.msra.mxu0 %v843
    %1212 = vmatprep.subr.bf16.mxu0 %v848
    %1213 = vmatpush1.bf16.msra.mxu0 %v847
    %1214 = vmatprep.subr.bf16.mxu0 %v852
    %1215 = vmatpush1.bf16.msra.mxu0 %v851
    %1216 = vmatprep.subr.bf16.mxu0 0
    %1217 = vmatpush1.bf16.msra.mxu0 0
    %1218 = vmatprep.subr.bf16.mxu0 0
    %1219 = vmatpush1.bf16.msra.mxu0 0
    %1220 = vmatprep.subr.bf16.mxu0 0
    %1221 = vmatpush1.bf16.msra.mxu0 0
    %1222 = vmatprep.subr.bf16.mxu0 0
    %1223 = vmatpush1.bf16.msra.mxu0 0
    %1224 = vmatprep.subr.bf16.mxu0 0
    %1225 = vmatpush1.bf16.msra.mxu0 0
    %1226 = vmatprep.subr.bf16.mxu0 0
    %1227 = vmatpush1.bf16.msra.mxu0 0
    %1228 = vmatprep.subr.bf16.mxu0 0
    %1229 = vmatpush1.bf16.msra.mxu0 0
    %1230 = vmatprep.subr.bf16.mxu0 0
    %1231 = vmatpush1.bf16.msra.mxu0 0
    %1232 = vmatprep.mubr.bf16.mxu0 0
    %1233 = vmatmul.mubr.bf16.gmra.mrb[0].mxu0 %v1143
    %v1234 = vpop.f32.mrb[0].mxu0
    %v1235 = vadd.f32 %v1151, %v1234
    %v1236 = vpop.f32.mrb[0].mxu0
    %v1237 = vadd.f32 %v1152, %v1236
    %v1238 = vpop.f32.mrb[0].mxu0
    %v1239 = vadd.f32 %v1155, %v1238
    %v1240 = vpop.f32.mrb[0].mxu0
    %v1241 = vadd.f32 %v1156, %v1240
    %1242 = vdwg.mxu0
    %v1243 = vmul.f32 %v1192, 0.5
    %v1244 = vmul.f32 %v1196, 0.5
    %v1245 = vtanh.pop %v1243
    %v1246 = vtanh.pop %v1244
    %v1247 = vmul.f32 %v1245, 0.5
    %v1248 = vmul.f32 %v1246, 0.5
    %v1249 = vadd.f32 %v1247, 0.5
    %v1250 = vadd.f32 %v1248, 0.5
    %v1251 = vmul.f32 %v1194, 0.5
    %v1252 = vmul.f32 %v1198, 0.5
    %v1253 = vtanh.pop %v1251
    %v1254 = vtanh.pop %v1252
    %v1255 = vmul.f32 %v1253, 0.5
    %v1256 = vmul.f32 %v1254, 0.5
    %v1257 = vadd.f32 %v1255, 0.5
    %v1258 = vadd.f32 %v1256, 0.5
    %v1259 = vtanh.pop %v1235
    %v1260 = vtanh.pop %v1239
    %v1261 = vmul.f32 %v1237, 0.5
    %v1262 = vmul.f32 %v1241, 0.5
    %v1263 = vtanh.pop %v1261
    %v1264 = vtanh.pop %v1262
    %v1265 = vmul.f32 %v1263, 0.5
    %v1266 = vmul.f32 %v1264, 0.5
    %v1267 = vadd.f32 %v1265, 0.5
    %v1268 = vadd.f32 %v1266, 0.5
    %v1269 = vmul.f32 %v1257, %v1137
    %v1270 = vmul.f32 %v1258, %v1138
    %v1271 = vmul.f32 %v1249, %v1259
    %v1272 = vmul.f32 %v1250, %v1260
    %v1273 = vadd.f32 %v1269, %v1271
    %v1274 = vadd.f32 %v1270, %v1272
    %v1275 = vtanh.pop %v1273
    %v1276 = vtanh.pop %v1274
    %v1277 = vmul.f32 %v1267, %v1275
    %v1278 = vmul.f32 %v1268, %v1276
    %v1279 = vpack.c.bf16 %v1278, %v1277
    %s1280 = scalar_lea.vmem [#allocation2], 96
    %v1281 = vld [vmem:[%s1280] sm:$0xff]
    %v1282 = vld [vmem:[%s1280 + $0x8] sm:$0xff]
    %v1283 = vld [vmem:[%s1280 + $0x10] sm:$0xff]
    %v1284 = vld [vmem:[%s1280 + $0x18] sm:$0xff]
    %v1285 = vunpack.c.l.bf16 %v1281
    %v1286 = vunpack.c.l.bf16 %v1282
    %v1287 = vunpack.c.l.bf16 %v1283
    %v1288 = vunpack.c.l.bf16 %v1284
    %v1289 = vunpack.c.h.bf16 %v1281
    %v1290 = vunpack.c.h.bf16 %v1282
    %v1291 = vunpack.c.h.bf16 %v1283
    %v1292 = vunpack.c.h.bf16 %v1284
    %1293 = vmatprep.subr.bf16.mxu0 %v822
    %1294 = vmatpush1.bf16.msra.mxu0 %v821
    %1295 = vmatprep.subr.bf16.mxu0 %v826
    %1296 = vmatpush1.bf16.msra.mxu0 %v825
    %1297 = vmatprep.subr.bf16.mxu0 %v830
    %1298 = vmatpush1.bf16.msra.mxu0 %v829
    %1299 = vmatprep.subr.bf16.mxu0 %v834
    %1300 = vmatpush1.bf16.msra.mxu0 %v833
    %1301 = vmatprep.subr.bf16.mxu0 %v838
    %1302 = vmatpush1.bf16.msra.mxu0 %v837
    %1303 = vmatprep.subr.bf16.mxu0 %v842
    %1304 = vmatpush1.bf16.msra.mxu0 %v841
    %1305 = vmatprep.subr.bf16.mxu0 %v846
    %1306 = vmatpush1.bf16.msra.mxu0 %v845
    %1307 = vmatprep.subr.bf16.mxu0 %v850
    %1308 = vmatpush1.bf16.msra.mxu0 %v849
    %1309 = vmatprep.subr.bf16.mxu0 0
    %1310 = vmatpush1.bf16.msra.mxu0 0
    %1311 = vmatprep.subr.bf16.mxu0 0
    %1312 = vmatpush1.bf16.msra.mxu0 0
    %1313 = vmatprep.subr.bf16.mxu0 0
    %1314 = vmatpush1.bf16.msra.mxu0 0
    %1315 = vmatprep.subr.bf16.mxu0 0
    %1316 = vmatpush1.bf16.msra.mxu0 0
    %1317 = vmatprep.subr.bf16.mxu0 0
    %1318 = vmatpush1.bf16.msra.mxu0 0
    %1319 = vmatprep.subr.bf16.mxu0 0
    %1320 = vmatpush1.bf16.msra.mxu0 0
    %1321 = vmatprep.subr.bf16.mxu0 0
    %1322 = vmatpush1.bf16.msra.mxu0 0
    %1323 = vmatprep.subr.bf16.mxu0 0
    %1324 = vmatpush1.bf16.msra.mxu0 0
    %1325 = vmatprep.mubr.bf16.mxu0 0
    %1326 = vmatmul.mubr.bf16.gmra.mrb[0].mxu0 %v1279
    %v1327 = vpop.f32.mrb[0].mxu0
    %v1328 = vadd.f32 %v1285, %v1327
    %v1329 = vpop.f32.mrb[0].mxu0
    %v1330 = vadd.f32 %v1286, %v1329
    %v1331 = vpop.f32.mrb[0].mxu0
    %v1332 = vadd.f32 %v1289, %v1331
    %v1333 = vpop.f32.mrb[0].mxu0
    %v1334 = vadd.f32 %v1290, %v1333
    %1335 = vdwg.mxu0
    %1336 = vmatprep.subr.bf16.mxu0 %v824
    %1337 = vmatpush1.bf16.msra.mxu0 %v823
    %1338 = vmatprep.subr.bf16.mxu0 %v828
    %1339 = vmatpush1.bf16.msra.mxu0 %v827
    %1340 = vmatprep.subr.bf16.mxu0 %v832
    %1341 = vmatpush1.bf16.msra.mxu0 %v831
    %1342 = vmatprep.subr.bf16.mxu0 %v836
    %1343 = vmatpush1.bf16.msra.mxu0 %v835
    %1344 = vmatprep.subr.bf16.mxu0 %v840
    %1345 = vmatpush1.bf16.msra.mxu0 %v839
    %1346 = vmatprep.subr.bf16.mxu0 %v844
    %1347 = vmatpush1.bf16.msra.mxu0 %v843
    %1348 = vmatprep.subr.bf16.mxu0 %v848
    %1349 = vmatpush1.bf16.msra.mxu0 %v847
    %1350 = vmatprep.subr.bf16.mxu0 %v852
    %1351 = vmatpush1.bf16.msra.mxu0 %v851
    %1352 = vmatprep.subr.bf16.mxu0 0
    %1353 = vmatpush1.bf16.msra.mxu0 0
    %1354 = vmatprep.subr.bf16.mxu0 0
    %1355 = vmatpush1.bf16.msra.mxu0 0
    %1356 = vmatprep.subr.bf16.mxu0 0
    %1357 = vmatpush1.bf16.msra.mxu0 0
    %1358 = vmatprep.subr.bf16.mxu0 0
    %1359 = vmatpush1.bf16.msra.mxu0 0
    %1360 = vmatprep.subr.bf16.mxu0 0
    %1361 = vmatpush1.bf16.msra.mxu0 0
    %1362 = vmatprep.subr.bf16.mxu0 0
    %1363 = vmatpush1.bf16.msra.mxu0 0
    %1364 = vmatprep.subr.bf16.mxu0 0
    %1365 = vmatpush1.bf16.msra.mxu0 0
    %1366 = vmatprep.subr.bf16.mxu0 0
    %1367 = vmatpush1.bf16.msra.mxu0 0
    %1368 = vmatprep.mubr.bf16.mxu0 0
    %1369 = vmatmul.mubr.bf16.gmra.mrb[0].mxu0 %v1279
    %v1370 = vpop.f32.mrb[0].mxu0
    %v1371 = vadd.f32 %v1287, %v1370
    %v1372 = vpop.f32.mrb[0].mxu0
    %v1373 = vadd.f32 %v1288, %v1372
    %v1374 = vpop.f32.mrb[0].mxu0
    %v1375 = vadd.f32 %v1291, %v1374
    %v1376 = vpop.f32.mrb[0].mxu0
    %v1377 = vadd.f32 %v1292, %v1376
    %1378 = vdwg.mxu0
    %v1379 = vmul.f32 %v1328, 0.5
    %v1380 = vmul.f32 %v1332, 0.5
    %v1381 = vtanh.pop %v1379
    %v1382 = vtanh.pop %v1380
    %v1383 = vmul.f32 %v1381, 0.5
    %v1384 = vmul.f32 %v1382, 0.5
    %v1385 = vadd.f32 %v1383, 0.5
    %v1386 = vadd.f32 %v1384, 0.5
    %v1387 = vmul.f32 %v1330, 0.5
    %v1388 = vmul.f32 %v1334, 0.5
    %v1389 = vtanh.pop %v1387
    %v1390 = vtanh.pop %v1388
    %v1391 = vmul.f32 %v1389, 0.5
    %v1392 = vmul.f32 %v1390, 0.5
    %v1393 = vadd.f32 %v1391, 0.5
    %v1394 = vadd.f32 %v1392, 0.5
    %v1395 = vtanh.pop %v1371
    %v1396 = vtanh.pop %v1375
    %v1397 = vmul.f32 %v1373, 0.5
    %v1398 = vmul.f32 %v1377, 0.5
    %v1399 = vtanh.pop %v1397
    %v1400 = vtanh.pop %v1398
    %v1401 = vmul.f32 %v1399, 0.5
    %v1402 = vmul.f32 %v1400, 0.5
    %v1403 = vadd.f32 %v1401, 0.5
    %v1404 = vadd.f32 %v1402, 0.5
    %v1405 = vmul.f32 %v1393, %v1273
    %v1406 = vmul.f32 %v1394, %v1274
    %v1407 = vmul.f32 %v1385, %v1395
    %v1408 = vmul.f32 %v1386, %v1396
    %v1409 = vadd.f32 %v1405, %v1407
    %v1410 = vadd.f32 %v1406, %v1408
    %v1411 = vtanh.pop %v1409
    %v1412 = vtanh.pop %v1410
    %v1413 = vmul.f32 %v1403, %v1411
    %v1414 = vmul.f32 %v1404, %v1412
    %v1415 = vpack.c.bf16 %v1414, %v1413
    %s1416 = scalar_lea.vmem [#allocation2], 128
    %v1417 = vld [vmem:[%s1416] sm:$0xff]
    %v1418 = vld [vmem:[%s1416 + $0x8] sm:$0xff]
    %v1419 = vld [vmem:[%s1416 + $0x10] sm:$0xff]
    %v1420 = vld [vmem:[%s1416 + $0x18] sm:$0xff]
    %v1421 = vunpack.c.l.bf16 %v1417
    %v1422 = vunpack.c.l.bf16 %v1418
    %v1423 = vunpack.c.l.bf16 %v1419
    %v1424 = vunpack.c.l.bf16 %v1420
    %v1425 = vunpack.c.h.bf16 %v1417
    %v1426 = vunpack.c.h.bf16 %v1418
    %v1427 = vunpack.c.h.bf16 %v1419
    %v1428 = vunpack.c.h.bf16 %v1420
    %1429 = vmatprep.subr.bf16.mxu0 %v822
    %1430 = vmatpush1.bf16.msra.mxu0 %v821
    %1431 = vmatprep.subr.bf16.mxu0 %v826
    %1432 = vmatpush1.bf16.msra.mxu0 %v825
    %1433 = vmatprep.subr.bf16.mxu0 %v830
    %1434 = vmatpush1.bf16.msra.mxu0 %v829
    %1435 = vmatprep.subr.bf16.mxu0 %v834
    %1436 = vmatpush1.bf16.msra.mxu0 %v833
    %1437 = vmatprep.subr.bf16.mxu0 %v838
    %1438 = vmatpush1.bf16.msra.mxu0 %v837
    %1439 = vmatprep.subr.bf16.mxu0 %v842
    %1440 = vmatpush1.bf16.msra.mxu0 %v841
    %1441 = vmatprep.subr.bf16.mxu0 %v846
    %1442 = vmatpush1.bf16.msra.mxu0 %v845
    %1443 = vmatprep.subr.bf16.mxu0 %v850
    %1444 = vmatpush1.bf16.msra.mxu0 %v849
    %1445 = vmatprep.subr.bf16.mxu0 0
    %1446 = vmatpush1.bf16.msra.mxu0 0
    %1447 = vmatprep.subr.bf16.mxu0 0
    %1448 = vmatpush1.bf16.msra.mxu0 0
    %1449 = vmatprep.subr.bf16.mxu0 0
    %1450 = vmatpush1.bf16.msra.mxu0 0
    %1451 = vmatprep.subr.bf16.mxu0 0
    %1452 = vmatpush1.bf16.msra.mxu0 0
    %1453 = vmatprep.subr.bf16.mxu0 0
    %1454 = vmatpush1.bf16.msra.mxu0 0
    %1455 = vmatprep.subr.bf16.mxu0 0
    %1456 = vmatpush1.bf16.msra.mxu0 0
    %1457 = vmatprep.subr.bf16.mxu0 0
    %1458 = vmatpush1.bf16.msra.mxu0 0
    %1459 = vmatprep.subr.bf16.mxu0 0
    %1460 = vmatpush1.bf16.msra.mxu0 0
    %1461 = vmatprep.mubr.bf16.mxu0 0
    %1462 = vmatmul.mubr.bf16.gmra.mrb[0].mxu0 %v1415
    %v1463 = vpop.f32.mrb[0].mxu0
    %v1464 = vadd.f32 %v1421, %v1463
    %v1465 = vpop.f32.mrb[0].mxu0
    %v1466 = vadd.f32 %v1422, %v1465
    %v1467 = vpop.f32.mrb[0].mxu0
    %v1468 = vadd.f32 %v1425, %v1467
    %v1469 = vpop.f32.mrb[0].mxu0
    %v1470 = vadd.f32 %v1426, %v1469
    %1471 = vdwg.mxu0
    %1472 = vmatprep.subr.bf16.mxu0 %v824
    %1473 = vmatpush1.bf16.msra.mxu0 %v823
    %1474 = vmatprep.subr.bf16.mxu0 %v828
    %1475 = vmatpush1.bf16.msra.mxu0 %v827
    %1476 = vmatprep.subr.bf16.mxu0 %v832
    %1477 = vmatpush1.bf16.msra.mxu0 %v831
    %1478 = vmatprep.subr.bf16.mxu0 %v836
    %1479 = vmatpush1.bf16.msra.mxu0 %v835
    %1480 = vmatprep.subr.bf16.mxu0 %v840
    %1481 = vmatpush1.bf16.msra.mxu0 %v839
    %1482 = vmatprep.subr.bf16.mxu0 %v844
    %1483 = vmatpush1.bf16.msra.mxu0 %v843
    %1484 = vmatprep.subr.bf16.mxu0 %v848
    %1485 = vmatpush1.bf16.msra.mxu0 %v847
    %1486 = vmatprep.subr.bf16.mxu0 %v852
    %1487 = vmatpush1.bf16.msra.mxu0 %v851
    %1488 = vmatprep.subr.bf16.mxu0 0
    %1489 = vmatpush1.bf16.msra.mxu0 0
    %1490 = vmatprep.subr.bf16.mxu0 0
    %1491 = vmatpush1.bf16.msra.mxu0 0
    %1492 = vmatprep.subr.bf16.mxu0 0
    %1493 = vmatpush1.bf16.msra.mxu0 0
    %1494 = vmatprep.subr.bf16.mxu0 0
    %1495 = vmatpush1.bf16.msra.mxu0 0
    %1496 = vmatprep.subr.bf16.mxu0 0
    %1497 = vmatpush1.bf16.msra.mxu0 0
    %1498 = vmatprep.subr.bf16.mxu0 0
    %1499 = vmatpush1.bf16.msra.mxu0 0
    %1500 = vmatprep.subr.bf16.mxu0 0
    %1501 = vmatpush1.bf16.msra.mxu0 0
    %1502 = vmatprep.subr.bf16.mxu0 0
    %1503 = vmatpush1.bf16.msra.mxu0 0
    %1504 = vmatprep.mubr.bf16.mxu0 0
    %1505 = vmatmul.mubr.bf16.gmra.mrb[0].mxu0 %v1415
    %v1506 = vpop.f32.mrb[0].mxu0
    %v1507 = vadd.f32 %v1423, %v1506
    %v1508 = vpop.f32.mrb[0].mxu0
    %v1509 = vadd.f32 %v1424, %v1508
    %v1510 = vpop.f32.mrb[0].mxu0
    %v1511 = vadd.f32 %v1427, %v1510
    %v1512 = vpop.f32.mrb[0].mxu0
    %v1513 = vadd.f32 %v1428, %v1512
    %1514 = vdwg.mxu0
    %v1515 = vmul.f32 %v1464, 0.5
    %v1516 = vmul.f32 %v1468, 0.5
    %v1517 = vtanh.pop %v1515
    %v1518 = vtanh.pop %v1516
    %v1519 = vmul.f32 %v1517, 0.5
    %v1520 = vmul.f32 %v1518, 0.5
    %v1521 = vadd.f32 %v1519, 0.5
    %v1522 = vadd.f32 %v1520, 0.5
    %v1523 = vmul.f32 %v1466, 0.5
    %v1524 = vmul.f32 %v1470, 0.5
    %v1525 = vtanh.pop %v1523
    %v1526 = vtanh.pop %v1524
    %v1527 = vmul.f32 %v1525, 0.5
    %v1528 = vmul.f32 %v1526, 0.5
    %v1529 = vadd.f32 %v1527, 0.5
    %v1530 = vadd.f32 %v1528, 0.5
    %v1531 = vtanh.pop %v1507
    %v1532 = vtanh.pop %v1511
    %v1533 = vmul.f32 %v1509, 0.5
    %v1534 = vmul.f32 %v1513, 0.5
    %v1535 = vtanh.pop %v1533
    %v1536 = vtanh.pop %v1534
    %v1537 = vmul.f32 %v1535, 0.5
    %v1538 = vmul.f32 %v1536, 0.5
    %v1539 = vadd.f32 %v1537, 0.5
    %v1540 = vadd.f32 %v1538, 0.5
    %v1541 = vmul.f32 %v1529, %v1409
    %v1542 = vmul.f32 %v1530, %v1410
    %v1543 = vmul.f32 %v1521, %v1531
    %v1544 = vmul.f32 %v1522, %v1532
    %v1545 = vadd.f32 %v1541, %v1543
    %v1546 = vadd.f32 %v1542, %v1544
    %v1547 = vtanh.pop %v1545
    %v1548 = vtanh.pop %v1546
    %v1549 = vmul.f32 %v1539, %v1547
    %v1550 = vmul.f32 %v1540, %v1548
    %v1551 = vpack.c.bf16 %v1550, %v1549
    %s1552 = scalar_lea.vmem [#allocation2], 160
    %v1553 = vld [vmem:[%s1552] sm:$0xff]
    %v1554 = vld [vmem:[%s1552 + $0x8] sm:$0xff]
    %v1555 = vld [vmem:[%s1552 + $0x10] sm:$0xff]
    %v1556 = vld [vmem:[%s1552 + $0x18] sm:$0xff]
    %v1557 = vunpack.c.l.bf16 %v1553
    %v1558 = vunpack.c.l.bf16 %v1554
    %v1559 = vunpack.c.l.bf16 %v1555
    %v1560 = vunpack.c.l.bf16 %v1556
    %v1561 = vunpack.c.h.bf16 %v1553
    %v1562 = vunpack.c.h.bf16 %v1554
    %v1563 = vunpack.c.h.bf16 %v1555
    %v1564 = vunpack.c.h.bf16 %v1556
    %1565 = vmatprep.subr.bf16.mxu0 %v822
    %1566 = vmatpush1.bf16.msra.mxu0 %v821
    %1567 = vmatprep.subr.bf16.mxu0 %v826
    %1568 = vmatpush1.bf16.msra.mxu0 %v825
    %1569 = vmatprep.subr.bf16.mxu0 %v830
    %1570 = vmatpush1.bf16.msra.mxu0 %v829
    %1571 = vmatprep.subr.bf16.mxu0 %v834
    %1572 = vmatpush1.bf16.msra.mxu0 %v833
    %1573 = vmatprep.subr.bf16.mxu0 %v838
    %1574 = vmatpush1.bf16.msra.mxu0 %v837
    %1575 = vmatprep.subr.bf16.mxu0 %v842
    %1576 = vmatpush1.bf16.msra.mxu0 %v841
    %1577 = vmatprep.subr.bf16.mxu0 %v846
    %1578 = vmatpush1.bf16.msra.mxu0 %v845
    %1579 = vmatprep.subr.bf16.mxu0 %v850
    %1580 = vmatpush1.bf16.msra.mxu0 %v849
    %1581 = vmatprep.subr.bf16.mxu0 0
    %1582 = vmatpush1.bf16.msra.mxu0 0
    %1583 = vmatprep.subr.bf16.mxu0 0
    %1584 = vmatpush1.bf16.msra.mxu0 0
    %1585 = vmatprep.subr.bf16.mxu0 0
    %1586 = vmatpush1.bf16.msra.mxu0 0
    %1587 = vmatprep.subr.bf16.mxu0 0
    %1588 = vmatpush1.bf16.msra.mxu0 0
    %1589 = vmatprep.subr.bf16.mxu0 0
    %1590 = vmatpush1.bf16.msra.mxu0 0
    %1591 = vmatprep.subr.bf16.mxu0 0
    %1592 = vmatpush1.bf16.msra.mxu0 0
    %1593 = vmatprep.subr.bf16.mxu0 0
    %1594 = vmatpush1.bf16.msra.mxu0 0
    %1595 = vmatprep.subr.bf16.mxu0 0
    %1596 = vmatpush1.bf16.msra.mxu0 0
    %1597 = vmatprep.mubr.bf16.mxu0 0
    %1598 = vmatmul.mubr.bf16.gmra.mrb[0].mxu0 %v1551
    %v1599 = vpop.f32.mrb[0].mxu0
    %v1600 = vadd.f32 %v1557, %v1599
    %v1601 = vpop.f32.mrb[0].mxu0
    %v1602 = vadd.f32 %v1558, %v1601
    %v1603 = vpop.f32.mrb[0].mxu0
    %v1604 = vadd.f32 %v1561, %v1603
    %v1605 = vpop.f32.mrb[0].mxu0
    %v1606 = vadd.f32 %v1562, %v1605
    %1607 = vdwg.mxu0
    %1608 = vmatprep.subr.bf16.mxu0 %v824
    %1609 = vmatpush1.bf16.msra.mxu0 %v823
    %1610 = vmatprep.subr.bf16.mxu0 %v828
    %1611 = vmatpush1.bf16.msra.mxu0 %v827
    %1612 = vmatprep.subr.bf16.mxu0 %v832
    %1613 = vmatpush1.bf16.msra.mxu0 %v831
    %1614 = vmatprep.subr.bf16.mxu0 %v836
    %1615 = vmatpush1.bf16.msra.mxu0 %v835
    %1616 = vmatprep.subr.bf16.mxu0 %v840
    %1617 = vmatpush1.bf16.msra.mxu0 %v839
    %1618 = vmatprep.subr.bf16.mxu0 %v844
    %1619 = vmatpush1.bf16.msra.mxu0 %v843
    %1620 = vmatprep.subr.bf16.mxu0 %v848
    %1621 = vmatpush1.bf16.msra.mxu0 %v847
    %1622 = vmatprep.subr.bf16.mxu0 %v852
    %1623 = vmatpush1.bf16.msra.mxu0 %v851
    %1624 = vmatprep.subr.bf16.mxu0 0
    %1625 = vmatpush1.bf16.msra.mxu0 0
    %1626 = vmatprep.subr.bf16.mxu0 0
    %1627 = vmatpush1.bf16.msra.mxu0 0
    %1628 = vmatprep.subr.bf16.mxu0 0
    %1629 = vmatpush1.bf16.msra.mxu0 0
    %1630 = vmatprep.subr.bf16.mxu0 0
    %1631 = vmatpush1.bf16.msra.mxu0 0
    %1632 = vmatprep.subr.bf16.mxu0 0
    %1633 = vmatpush1.bf16.msra.mxu0 0
    %1634 = vmatprep.subr.bf16.mxu0 0
    %1635 = vmatpush1.bf16.msra.mxu0 0
    %1636 = vmatprep.subr.bf16.mxu0 0
    %1637 = vmatpush1.bf16.msra.mxu0 0
    %1638 = vmatprep.subr.bf16.mxu0 0
    %1639 = vmatpush1.bf16.msra.mxu0 0
    %1640 = vmatprep.mubr.bf16.mxu0 0
    %1641 = vmatmul.mubr.bf16.gmra.mrb[0].mxu0 %v1551
    %v1642 = vpop.f32.mrb[0].mxu0
    %v1643 = vadd.f32 %v1559, %v1642
    %v1644 = vpop.f32.mrb[0].mxu0
    %v1645 = vadd.f32 %v1560, %v1644
    %v1646 = vpop.f32.mrb[0].mxu0
    %v1647 = vadd.f32 %v1563, %v1646
    %v1648 = vpop.f32.mrb[0].mxu0
    %v1649 = vadd.f32 %v1564, %v1648
    %1650 = vdwg.mxu0
    %v1651 = vmul.f32 %v1600, 0.5
    %v1652 = vmul.f32 %v1604, 0.5
    %v1653 = vtanh.pop %v1651
    %v1654 = vtanh.pop %v1652
    %v1655 = vmul.f32 %v1653, 0.5
    %v1656 = vmul.f32 %v1654, 0.5
    %v1657 = vadd.f32 %v1655, 0.5
    %v1658 = vadd.f32 %v1656, 0.5
    %v1659 = vmul.f32 %v1602, 0.5
    %v1660 = vmul.f32 %v1606, 0.5
    %v1661 = vtanh.pop %v1659
    %v1662 = vtanh.pop %v1660
    %v1663 = vmul.f32 %v1661, 0.5
    %v1664 = vmul.f32 %v1662, 0.5
    %v1665 = vadd.f32 %v1663, 0.5
    %v1666 = vadd.f32 %v1664, 0.5
    %v1667 = vtanh.pop %v1643
    %v1668 = vtanh.pop %v1647
    %v1669 = vmul.f32 %v1645, 0.5
    %v1670 = vmul.f32 %v1649, 0.5
    %v1671 = vtanh.pop %v1669
    %v1672 = vtanh.pop %v1670
    %v1673 = vmul.f32 %v1671, 0.5
    %v1674 = vmul.f32 %v1672, 0.5
    %v1675 = vadd.f32 %v1673, 0.5
    %v1676 = vadd.f32 %v1674, 0.5
    %v1677 = vmul.f32 %v1665, %v1545
    %v1678 = vmul.f32 %v1666, %v1546
    %v1679 = vmul.f32 %v1657, %v1667
    %v1680 = vmul.f32 %v1658, %v1668
    %v1681 = vadd.f32 %v1677, %v1679
    %v1682 = vadd.f32 %v1678, %v1680
    %v1683 = vtanh.pop %v1681
    %v1684 = vtanh.pop %v1682
    %v1685 = vmul.f32 %v1675, %v1683
    %v1686 = vmul.f32 %v1676, %v1684
    %v1687 = vpack.c.bf16 %v1686, %v1685
    %s1688 = scalar_lea.vmem [#allocation2], 192
    %v1689 = vld [vmem:[%s1688] sm:$0xff]
    %v1690 = vld [vmem:[%s1688 + $0x8] sm:$0xff]
    %v1691 = vld [vmem:[%s1688 + $0x10] sm:$0xff]
    %v1692 = vld [vmem:[%s1688 + $0x18] sm:$0xff]
    %v1693 = vunpack.c.l.bf16 %v1689
    %v1694 = vunpack.c.l.bf16 %v1690
    %v1695 = vunpack.c.l.bf16 %v1691
    %v1696 = vunpack.c.l.bf16 %v1692
    %v1697 = vunpack.c.h.bf16 %v1689
    %v1698 = vunpack.c.h.bf16 %v1690
    %v1699 = vunpack.c.h.bf16 %v1691
    %v1700 = vunpack.c.h.bf16 %v1692
    %1701 = vmatprep.subr.bf16.mxu0 %v822
    %1702 = vmatpush1.bf16.msra.mxu0 %v821
    %1703 = vmatprep.subr.bf16.mxu0 %v826
    %1704 = vmatpush1.bf16.msra.mxu0 %v825
    %1705 = vmatprep.subr.bf16.mxu0 %v830
    %1706 = vmatpush1.bf16.msra.mxu0 %v829
    %1707 = vmatprep.subr.bf16.mxu0 %v834
    %1708 = vmatpush1.bf16.msra.mxu0 %v833
    %1709 = vmatprep.subr.bf16.mxu0 %v838
    %1710 = vmatpush1.bf16.msra.mxu0 %v837
    %1711 = vmatprep.subr.bf16.mxu0 %v842
    %1712 = vmatpush1.bf16.msra.mxu0 %v841
    %1713 = vmatprep.subr.bf16.mxu0 %v846
    %1714 = vmatpush1.bf16.msra.mxu0 %v845
    %1715 = vmatprep.subr.bf16.mxu0 %v850
    %1716 = vmatpush1.bf16.msra.mxu0 %v849
    %1717 = vmatprep.subr.bf16.mxu0 0
    %1718 = vmatpush1.bf16.msra.mxu0 0
    %1719 = vmatprep.subr.bf16.mxu0 0
    %1720 = vmatpush1.bf16.msra.mxu0 0
    %1721 = vmatprep.subr.bf16.mxu0 0
    %1722 = vmatpush1.bf16.msra.mxu0 0
    %1723 = vmatprep.subr.bf16.mxu0 0
    %1724 = vmatpush1.bf16.msra.mxu0 0
    %1725 = vmatprep.subr.bf16.mxu0 0
    %1726 = vmatpush1.bf16.msra.mxu0 0
    %1727 = vmatprep.subr.bf16.mxu0 0
    %1728 = vmatpush1.bf16.msra.mxu0 0
    %1729 = vmatprep.subr.bf16.mxu0 0
    %1730 = vmatpush1.bf16.msra.mxu0 0
    %1731 = vmatprep.subr.bf16.mxu0 0
    %1732 = vmatpush1.bf16.msra.mxu0 0
    %1733 = vmatprep.mubr.bf16.mxu0 0
    %1734 = vmatmul.mubr.bf16.gmra.mrb[0].mxu0 %v1687
    %v1735 = vpop.f32.mrb[0].mxu0
    %v1736 = vadd.f32 %v1693, %v1735
    %v1737 = vpop.f32.mrb[0].mxu0
    %v1738 = vadd.f32 %v1694, %v1737
    %v1739 = vpop.f32.mrb[0].mxu0
    %v1740 = vadd.f32 %v1697, %v1739
    %v1741 = vpop.f32.mrb[0].mxu0
    %v1742 = vadd.f32 %v1698, %v1741
    %1743 = vdwg.mxu0
    %1744 = vmatprep.subr.bf16.mxu0 %v824
    %1745 = vmatpush1.bf16.msra.mxu0 %v823
    %1746 = vmatprep.subr.bf16.mxu0 %v828
    %1747 = vmatpush1.bf16.msra.mxu0 %v827
    %1748 = vmatprep.subr.bf16.mxu0 %v832
    %1749 = vmatpush1.bf16.msra.mxu0 %v831
    %1750 = vmatprep.subr.bf16.mxu0 %v836
    %1751 = vmatpush1.bf16.msra.mxu0 %v835
    %1752 = vmatprep.subr.bf16.mxu0 %v840
    %1753 = vmatpush1.bf16.msra.mxu0 %v839
    %1754 = vmatprep.subr.bf16.mxu0 %v844
    %1755 = vmatpush1.bf16.msra.mxu0 %v843
    %1756 = vmatprep.subr.bf16.mxu0 %v848
    %1757 = vmatpush1.bf16.msra.mxu0 %v847
    %1758 = vmatprep.subr.bf16.mxu0 %v852
    %1759 = vmatpush1.bf16.msra.mxu0 %v851
    %1760 = vmatprep.subr.bf16.mxu0 0
    %1761 = vmatpush1.bf16.msra.mxu0 0
    %1762 = vmatprep.subr.bf16.mxu0 0
    %1763 = vmatpush1.bf16.msra.mxu0 0
    %1764 = vmatprep.subr.bf16.mxu0 0
    %1765 = vmatpush1.bf16.msra.mxu0 0
    %1766 = vmatprep.subr.bf16.mxu0 0
    %1767 = vmatpush1.bf16.msra.mxu0 0
    %1768 = vmatprep.subr.bf16.mxu0 0
    %1769 = vmatpush1.bf16.msra.mxu0 0
    %1770 = vmatprep.subr.bf16.mxu0 0
    %1771 = vmatpush1.bf16.msra.mxu0 0
    %1772 = vmatprep.subr.bf16.mxu0 0
    %1773 = vmatpush1.bf16.msra.mxu0 0
    %1774 = vmatprep.subr.bf16.mxu0 0
    %1775 = vmatpush1.bf16.msra.mxu0 0
    %1776 = vmatprep.mubr.bf16.mxu0 0
    %1777 = vmatmul.mubr.bf16.gmra.mrb[0].mxu0 %v1687
    %v1778 = vpop.f32.mrb[0].mxu0
    %v1779 = vadd.f32 %v1695, %v1778
    %v1780 = vpop.f32.mrb[0].mxu0
    %v1781 = vadd.f32 %v1696, %v1780
    %v1782 = vpop.f32.mrb[0].mxu0
    %v1783 = vadd.f32 %v1699, %v1782
    %v1784 = vpop.f32.mrb[0].mxu0
    %v1785 = vadd.f32 %v1700, %v1784
    %1786 = vdwg.mxu0
    %v1787 = vmul.f32 %v1736, 0.5
    %v1788 = vmul.f32 %v1740, 0.5
    %v1789 = vtanh.pop %v1787
    %v1790 = vtanh.pop %v1788
    %v1791 = vmul.f32 %v1789, 0.5
    %v1792 = vmul.f32 %v1790, 0.5
    %v1793 = vadd.f32 %v1791, 0.5
    %v1794 = vadd.f32 %v1792, 0.5
    %v1795 = vmul.f32 %v1738, 0.5
    %v1796 = vmul.f32 %v1742, 0.5
    %v1797 = vtanh.pop %v1795
    %v1798 = vtanh.pop %v1796
    %v1799 = vmul.f32 %v1797, 0.5
    %v1800 = vmul.f32 %v1798, 0.5
    %v1801 = vadd.f32 %v1799, 0.5
    %v1802 = vadd.f32 %v1800, 0.5
    %v1803 = vtanh.pop %v1779
    %v1804 = vtanh.pop %v1783
    %v1805 = vmul.f32 %v1781, 0.5
    %v1806 = vmul.f32 %v1785, 0.5
    %v1807 = vtanh.pop %v1805
    %v1808 = vtanh.pop %v1806
    %v1809 = vmul.f32 %v1807, 0.5
    %v1810 = vmul.f32 %v1808, 0.5
    %v1811 = vadd.f32 %v1809, 0.5
    %v1812 = vadd.f32 %v1810, 0.5
    %v1813 = vmul.f32 %v1801, %v1681
    %v1814 = vmul.f32 %v1802, %v1682
    %v1815 = vmul.f32 %v1793, %v1803
    %v1816 = vmul.f32 %v1794, %v1804
    %v1817 = vadd.f32 %v1813, %v1815
    %v1818 = vadd.f32 %v1814, %v1816
    %v1819 = vtanh.pop %v1817
    %v1820 = vtanh.pop %v1818
    %v1821 = vmul.f32 %v1811, %v1819
    %v1822 = vmul.f32 %v1812, %v1820
    %v1823 = vpack.c.bf16 %v1822, %v1821
    %s1824 = scalar_lea.vmem [#allocation2], 224
    %v1825 = vld [vmem:[%s1824] sm:$0xff]
    %v1826 = vld [vmem:[%s1824 + $0x8] sm:$0xff]
    %v1827 = vld [vmem:[%s1824 + $0x10] sm:$0xff]
    %v1828 = vld [vmem:[%s1824 + $0x18] sm:$0xff]
    %v1829 = vunpack.c.l.bf16 %v1825
    %v1830 = vunpack.c.l.bf16 %v1826
    %v1831 = vunpack.c.l.bf16 %v1827
    %v1832 = vunpack.c.l.bf16 %v1828
    %v1833 = vunpack.c.h.bf16 %v1825
    %v1834 = vunpack.c.h.bf16 %v1826
    %v1835 = vunpack.c.h.bf16 %v1827
    %v1836 = vunpack.c.h.bf16 %v1828
    %1837 = vmatprep.subr.bf16.mxu0 %v822
    %1838 = vmatpush1.bf16.msra.mxu0 %v821
    %1839 = vmatprep.subr.bf16.mxu0 %v826
    %1840 = vmatpush1.bf16.msra.mxu0 %v825
    %1841 = vmatprep.subr.bf16.mxu0 %v830
    %1842 = vmatpush1.bf16.msra.mxu0 %v829
    %1843 = vmatprep.subr.bf16.mxu0 %v834
    %1844 = vmatpush1.bf16.msra.mxu0 %v833
    %1845 = vmatprep.subr.bf16.mxu0 %v838
    %1846 = vmatpush1.bf16.msra.mxu0 %v837
    %1847 = vmatprep.subr.bf16.mxu0 %v842
    %1848 = vmatpush1.bf16.msra.mxu0 %v841
    %1849 = vmatprep.subr.bf16.mxu0 %v846
    %1850 = vmatpush1.bf16.msra.mxu0 %v845
    %1851 = vmatprep.subr.bf16.mxu0 %v850
    %1852 = vmatpush1.bf16.msra.mxu0 %v849
    %1853 = vmatprep.subr.bf16.mxu0 0
    %1854 = vmatpush1.bf16.msra.mxu0 0
    %1855 = vmatprep.subr.bf16.mxu0 0
    %1856 = vmatpush1.bf16.msra.mxu0 0
    %1857 = vmatprep.subr.bf16.mxu0 0
    %1858 = vmatpush1.bf16.msra.mxu0 0
    %1859 = vmatprep.subr.bf16.mxu0 0
    %1860 = vmatpush1.bf16.msra.mxu0 0
    %1861 = vmatprep.subr.bf16.mxu0 0
    %1862 = vmatpush1.bf16.msra.mxu0 0
    %1863 = vmatprep.subr.bf16.mxu0 0
    %1864 = vmatpush1.bf16.msra.mxu0 0
    %1865 = vmatprep.subr.bf16.mxu0 0
    %1866 = vmatpush1.bf16.msra.mxu0 0
    %1867 = vmatprep.subr.bf16.mxu0 0
    %1868 = vmatpush1.bf16.msra.mxu0 0
    %1869 = vmatprep.mubr.bf16.mxu0 0
    %1870 = vmatmul.mubr.bf16.gmra.mrb[0].mxu0 %v1823
    %v1871 = vpop.f32.mrb[0].mxu0
    %v1872 = vadd.f32 %v1829, %v1871
    %v1873 = vpop.f32.mrb[0].mxu0
    %v1874 = vadd.f32 %v1830, %v1873
    %v1875 = vpop.f32.mrb[0].mxu0
    %v1876 = vadd.f32 %v1833, %v1875
    %v1877 = vpop.f32.mrb[0].mxu0
    %v1878 = vadd.f32 %v1834, %v1877
    %1879 = vdwg.mxu0
    %1880 = vmatprep.subr.bf16.mxu0 %v824
    %1881 = vmatpush1.bf16.msra.mxu0 %v823
    %1882 = vmatprep.subr.bf16.mxu0 %v828
    %1883 = vmatpush1.bf16.msra.mxu0 %v827
    %1884 = vmatprep.subr.bf16.mxu0 %v832
    %1885 = vmatpush1.bf16.msra.mxu0 %v831
    %1886 = vmatprep.subr.bf16.mxu0 %v836
    %1887 = vmatpush1.bf16.msra.mxu0 %v835
    %1888 = vmatprep.subr.bf16.mxu0 %v840
    %1889 = vmatpush1.bf16.msra.mxu0 %v839
    %1890 = vmatprep.subr.bf16.mxu0 %v844
    %1891 = vmatpush1.bf16.msra.mxu0 %v843
    %1892 = vmatprep.subr.bf16.mxu0 %v848
    %1893 = vmatpush1.bf16.msra.mxu0 %v847
    %1894 = vmatprep.subr.bf16.mxu0 %v852
    %1895 = vmatpush1.bf16.msra.mxu0 %v851
    %1896 = vmatprep.subr.bf16.mxu0 0
    %1897 = vmatpush1.bf16.msra.mxu0 0
    %1898 = vmatprep.subr.bf16.mxu0 0
    %1899 = vmatpush1.bf16.msra.mxu0 0
    %1900 = vmatprep.subr.bf16.mxu0 0
    %1901 = vmatpush1.bf16.msra.mxu0 0
    %1902 = vmatprep.subr.bf16.mxu0 0
    %1903 = vmatpush1.bf16.msra.mxu0 0
    %1904 = vmatprep.subr.bf16.mxu0 0
    %1905 = vmatpush1.bf16.msra.mxu0 0
    %1906 = vmatprep.subr.bf16.mxu0 0
    %1907 = vmatpush1.bf16.msra.mxu0 0
    %1908 = vmatprep.subr.bf16.mxu0 0
    %1909 = vmatpush1.bf16.msra.mxu0 0
    %1910 = vmatprep.subr.bf16.mxu0 0
    %1911 = vmatpush1.bf16.msra.mxu0 0
    %1912 = vmatprep.mubr.bf16.mxu0 0
    %1913 = vmatmul.mubr.bf16.gmra.mrb[0].mxu0 %v1823
    %v1914 = vpop.f32.mrb[0].mxu0
    %v1915 = vadd.f32 %v1831, %v1914
    %v1916 = vpop.f32.mrb[0].mxu0
    %v1917 = vadd.f32 %v1832, %v1916
    %v1918 = vpop.f32.mrb[0].mxu0
    %v1919 = vadd.f32 %v1835, %v1918
    %v1920 = vpop.f32.mrb[0].mxu0
    %v1921 = vadd.f32 %v1836, %v1920
    %1922 = vdwg.mxu0
    %v1923 = vmul.f32 %v1872, 0.5
    %v1924 = vmul.f32 %v1876, 0.5
    %v1925 = vtanh.pop %v1923
    %v1926 = vtanh.pop %v1924
    %v1927 = vmul.f32 %v1925, 0.5
    %v1928 = vmul.f32 %v1926, 0.5
    %v1929 = vadd.f32 %v1927, 0.5
    %v1930 = vadd.f32 %v1928, 0.5
    %v1931 = vmul.f32 %v1874, 0.5
    %v1932 = vmul.f32 %v1878, 0.5
    %v1933 = vtanh.pop %v1931
    %v1934 = vtanh.pop %v1932
    %v1935 = vmul.f32 %v1933, 0.5
    %v1936 = vmul.f32 %v1934, 0.5
    %v1937 = vadd.f32 %v1935, 0.5
    %v1938 = vadd.f32 %v1936, 0.5
    %v1939 = vtanh.pop %v1915
    %v1940 = vtanh.pop %v1919
    %v1941 = vmul.f32 %v1917, 0.5
    %v1942 = vmul.f32 %v1921, 0.5
    %v1943 = vtanh.pop %v1941
    %v1944 = vtanh.pop %v1942
    %v1945 = vmul.f32 %v1943, 0.5
    %v1946 = vmul.f32 %v1944, 0.5
    %v1947 = vadd.f32 %v1945, 0.5
    %v1948 = vadd.f32 %v1946, 0.5
    %v1949 = vmul.f32 %v1937, %v1817
    %v1950 = vmul.f32 %v1938, %v1818
    %v1951 = vmul.f32 %v1929, %v1939
    %v1952 = vmul.f32 %v1930, %v1940
    %v1953 = vadd.f32 %v1949, %v1951
    %v1954 = vadd.f32 %v1950, %v1952
    %v1955 = vtanh.pop %v1953
    %v1956 = vtanh.pop %v1954
    %v1957 = vmul.f32 %v1947, %v1955
    %v1958 = vmul.f32 %v1948, %v1956
    %v1959 = vpack.c.bf16 %v1958, %v1957
    %1960 = vst [vmem:[#allocation3] sm:$0xff] %v1959
    %1961 = vst [vmem:[#allocation4] sm:$0xff] %v1953
    %1962 = vst [vmem:[#allocation4 + $0x8] sm:$0xff] %v1954
    // Predicated region
    $region54: #{tpu_custom_call.1} parent=1 // pred_check
      %p1963 = pneg %p103
    $region55: #{tpu_custom_call.1} parent=1 // pred_check_branch
      %1965 = sbr.rel (%p1963) target = $region57
    $region56: #{tpu_custom_call.1} parent=1 // pred_region
      %v1966 = vld [vmem:[#allocation13] sm:$0xf]
      %v1967 = vld [vmem:[#allocation13 + $0x4] sm:$0xf]
      %v1968 = vld [vmem:[#allocation13 + $0x8] sm:$0xf]
      %v1969 = vld [vmem:[#allocation13 + $0xc] sm:$0xf]
      %v1970 = vld [vmem:[#allocation13 + $0x10] sm:$0xf]
      %v1971 = vld [vmem:[#allocation13 + $0x14] sm:$0xf]
      %v1972 = vld [vmem:[#allocation13 + $0x18] sm:$0xf]
      %v1973 = vld [vmem:[#allocation13 + $0x1c] sm:$0xf]
      %v1974 = vld [vmem:[#allocation13 + $0x20] sm:$0xf]
      %v1975 = vld [vmem:[#allocation13 + $0x24] sm:$0xf]
      %v1976 = vld [vmem:[#allocation13 + $0x28] sm:$0xf]
      %v1977 = vld [vmem:[#allocation13 + $0x2c] sm:$0xf]
      %v1978 = vld [vmem:[#allocation13 + $0x30] sm:$0xf]
      %v1979 = vld [vmem:[#allocation13 + $0x34] sm:$0xf]
      %v1980 = vld [vmem:[#allocation13 + $0x38] sm:$0xf]
      %v1981 = vld [vmem:[#allocation13 + $0x3c] sm:$0xf]
      %v1982 = vld [vmem:[#allocation14] sm:$0x1]
      %v1984 = vlaneseq
      %v1985 = vshrl.u32 %v1984, 7
      %v1986 = vsub.s32 0, %v1985
      %v1987 = vrot.slane %v1982, %v1986
      %v2005 = vunpack.c.l.b16 %v1966
      %v2006 = vunpack.c.l.b16 %v1967
      %v2007 = vunpack.c.l.b16 %v1968
      %v2008 = vunpack.c.l.b16 %v1969
      %v2009 = vunpack.c.l.b16 %v1970
      %v2010 = vunpack.c.l.b16 %v1971
      %v2011 = vunpack.c.l.b16 %v1972
      %v2012 = vunpack.c.l.b16 %v1973
      %v2013 = vunpack.c.l.b16 %v1974
      %v2014 = vunpack.c.l.b16 %v1975
      %v2015 = vunpack.c.l.b16 %v1976
      %v2016 = vunpack.c.l.b16 %v1977
      %v2017 = vunpack.c.l.b16 %v1978
      %v2018 = vunpack.c.l.b16 %v1979
      %v2019 = vunpack.c.l.b16 %v1980
      %v2020 = vunpack.c.l.b16 %v1981
      %v2021 = vpack.c.b16 %v2006, %v2005
      %v2022 = vpack.c.b16 %v2008, %v2007
      %v2023 = vpack.c.b16 %v2010, %v2009
      %v2024 = vpack.c.b16 %v2012, %v2011
      %v2025 = vpack.c.b16 %v2014, %v2013
      %v2026 = vpack.c.b16 %v2016, %v2015
      %v2027 = vpack.c.b16 %v2018, %v2017
      %v2028 = vpack.c.b16 %v2020, %v2019
      %2037 = vmatprep.subr.bf16.mxu0 0
      %2038 = vmatpush1.bf16.msra.mxu0 %v2021
      %2039 = vmatprep.subr.bf16.mxu0 0
      %2040 = vmatpush1.bf16.msra.mxu0 %v2022
      %2041 = vmatprep.subr.bf16.mxu0 0
      %2042 = vmatpush1.bf16.msra.mxu0 %v2023
      %2043 = vmatprep.subr.bf16.mxu0 0
      %2044 = vmatpush1.bf16.msra.mxu0 %v2024
      %2045 = vmatprep.subr.bf16.mxu0 0
      %2046 = vmatpush1.bf16.msra.mxu0 %v2025
      %2047 = vmatprep.subr.bf16.mxu0 0
      %2048 = vmatpush1.bf16.msra.mxu0 %v2026
      %2049 = vmatprep.subr.bf16.mxu0 0
      %2050 = vmatpush1.bf16.msra.mxu0 %v2027
      %2051 = vmatprep.subr.bf16.mxu0 0
      %2052 = vmatpush1.bf16.msra.mxu0 %v2028
      %2053 = vmatprep.subr.bf16.mxu0 0
      %2054 = vmatpush1.bf16.msra.mxu0 0
      %2055 = vmatprep.subr.bf16.mxu0 0
      %2056 = vmatpush1.bf16.msra.mxu0 0
      %2057 = vmatprep.subr.bf16.mxu0 0
      %2058 = vmatpush1.bf16.msra.mxu0 0
      %2059 = vmatprep.subr.bf16.mxu0 0
      %2060 = vmatpush1.bf16.msra.mxu0 0
      %2061 = vmatprep.subr.bf16.mxu0 0
      %2062 = vmatpush1.bf16.msra.mxu0 0
      %2063 = vmatprep.subr.bf16.mxu0 0
      %2064 = vmatpush1.bf16.msra.mxu0 0
      %2065 = vmatprep.subr.bf16.mxu0 0
      %2066 = vmatpush1.bf16.msra.mxu0 0
      %2067 = vmatprep.subr.bf16.mxu0 0
      %2068 = vmatpush1.bf16.msra.mxu0 0
      %2069 = vmatprep.mubr.bf16.mxu0 0
      %2070 = vmatmul.mubr.bf16.gmra.mrb[0].mxu0 %v1959
      %v2071 = vpop.f32.mrb[0].mxu0
      %v2072 = vadd.f32 %v1987, %v2071
      %v2073 = vpop.f32.mrb[0].mxu0
      %v2074 = vpop.f32.mrb[0].mxu0
      %v2075 = vadd.f32 %v1987, %v2074
      %v2076 = vpop.f32.mrb[0].mxu0
      %2077 = vdwg.mxu0
      %2078 = vst [vmem:[#allocation16] sm:$0xff] %v2072
      %2079 = vst [vmem:[#allocation16 + $0x8] sm:$0xff] %v2075
    $region57: #{tpu_custom_call.1} parent=1 // pred_fallthru
      _
    // Predicated region
    $region58: #{tpu_custom_call.1} parent=1 // pred_check
      _
    $region59: #{tpu_custom_call.1} parent=1 // pred_check_branch
      %2081 = sbr.rel (0) target = $region61
    $region60: #{tpu_custom_call.1} parent=1 // pred_region
      %s2083 = ssub.s32 256, 256
      %2084 = vsyncadd [#allocation7], %s2083
      %s2085 = sshll.u32 [#allocation16], 4
      %s2086 = int_to_ptr.vmem [resolvable:$true] %s2085
      %2091 = dma.vmem_to_hbm [thread:$0]  %s2086, 256, %s6, [#allocation7], 128, 128, 8
    $region61: #{tpu_custom_call.1} parent=1 // pred_fallthru
      _
    // Predicated region
    $region62: #{tpu_custom_call.1} parent=1 // pred_check
      _
    $region63: #{tpu_custom_call.1} parent=1 // pred_check_branch
      %2093 = sbr.rel (0) target = $region65
    $region64: #{tpu_custom_call.1} parent=1 // pred_region
      %2094 = dma.done [#allocation7], 256
    $region65: #{tpu_custom_call.1} parent=1 // pred_fallthru
      _
    %2095 = vsyncpa [#allocation6], 1
    %2096 = vsyncpa [#allocation9], 1
    %2097 = vsyncpa [#allocation12], 1
    %2098 = vsyncpa [#allocation15], 1
    %2099 = vsyncpa [#allocation7], 1

</llo_original>
